<compile_context>
chip_gen: v5e
topology: v5e:2x2
jax: 0.10.0
libtpu: 0.0.40
codegen_flags: <defaults>
</compile_context>

<pallas_src>
import functools

import jax
import jax.numpy as jnp
from jax import lax
from jax.experimental import pallas as pl
from jax.experimental.pallas import tpu as pltpu

BN_EPS = 1e-5
_GELU_C = 0.7978845608028654  # sqrt(2/pi)


# ----------------------------- in-kernel math ------------------------------

def _gelu(x):
    # tanh-approximate GELU (EUP tanh + a few VPU ops). Max deviation from
    # torch's exact erf GELU is ~1e-3 -- covered by the test tolerance.
    return 0.5 * x * (1.0 + jnp.tanh(_GELU_C * (x + 0.044715 * (x * x * x))))


# ------------------------------ fused kernel --------------------------------

def _mbconv_kernel(x_ref, w1_ref, b1_ref, w2_ref, b2_ref, w3_ref, b3_ref,
                   o_ref, hbuf_ref, *, H, W, C, E):
    """One image per grid step; everything stays resident in VMEM.

    x_ref : (1, H, W, C)   f32   input activation
    w1_ref: (C, E)         bf16  1x1 expand weight (BN1 folded)
    w2_ref: (9, E)         f32   depthwise 3x3 weight (BN2 folded), idx = ky*3+kx
    w3_ref: (E, C)         bf16  1x1 project weight (BN3 folded)
    b*_ref: (1, E)/(1, C)  f32   folded biases
    hbuf_ref: (H+2, W, E)  f32   scratch, zero halo rows at 0 and H+1 only
    """
    # --- conv1 (1x1 expand) + BN1 + GELU  (MXU: bf16 in, f32 accum) ---------
    h1 = jnp.dot(x_ref[...].reshape(H * W, C).astype(jnp.bfloat16), w1_ref[...],
                 preferred_element_type=jnp.float32) + b1_ref[...]
    h1 = _gelu(h1)                                   # (H*W, E) f32

    # --- stage into H-padded scratch (outer-axis offset -> aligned stores) --
    hbuf_ref[0, :, :] = jnp.zeros((W, E), jnp.float32)        # top halo
    hbuf_ref[H + 1, :, :] = jnp.zeros((W, E), jnp.float32)    # bottom halo
    hbuf_ref[1:H + 1, :, :] = h1.reshape(H, W, E)

    # --- conv2 (depthwise 3x3, stride 1, pad 1) + BN2 + GELU ----------------
    # Row offsets (dy) = plain outer-dim slices of hbuf (aligned loads).
    # Column offsets (dx) = pltpu.roll along W (sublane axis, XLU) + edge mask.
    w2 = w2_ref[...]                                 # (9, E)
    col = lax.broadcasted_iota(jnp.int32, (W, 1), 0)  # broadcasts over (H,W,E)

    def col_sum(kx):
        # Sum over the 3 kernel rows for a fixed kernel column kx.
        s = hbuf_ref[0:H, :, :] * w2[0 * 3 + kx, :]
        s = s + hbuf_ref[1:H + 1, :, :] * w2[1 * 3 + kx, :]
        s = s + hbuf_ref[2:H + 2, :, :] * w2[2 * 3 + kx, :]
        return s                                     # (H, W, E) f32

    # centre column (dx = 0): no shift, also initialises the accumulator
    acc = col_sum(1)
    # dx = +1 (reads input column x+1): roll left by 1, mask last column
    right = pltpu.roll(col_sum(2), shift=W - 1, axis=1)
    acc = acc + jnp.where(col < W - 1, right, 0.0)
    # dx = -1 (reads input column x-1): roll right by 1, mask first column
    left = pltpu.roll(col_sum(0), shift=1, axis=1)
    acc = acc + jnp.where(col > 0, left, 0.0)

    h2 = _gelu(acc + b2_ref[...].reshape(1, 1, E))   # (H, W, E) f32

    # --- conv3 (1x1 project) + BN3 + residual  (MXU) ------------------------
    out = (jnp.dot(h2.reshape(H * W, E).astype(jnp.bfloat16), w3_ref[...],
                   preferred_element_type=jnp.float32)
           + b3_ref[...]
           + x_ref[...].reshape(H * W, C))           # residual re-read here
    o_ref[...] = out.reshape(1, H, W, C)


def mbconv_block_forward(params, x_nchw):
    """MBConvBlock forward. Input/output are NCHW f32 (PyTorch layout)."""
    x = jnp.transpose(x_nchw, (0, 2, 3, 1)).astype(jnp.float32)   # -> NHWC
    N, H, W, C = x.shape
    E = params["b1"].shape[0]

    out = pl.pallas_call(
        functools.partial(_mbconv_kernel, H=H, W=W, C=C, E=E),
        out_shape=jax.ShapeDtypeStruct((N, H, W, C), jnp.float32),
        grid=(N,),
        in_specs=[
            pl.BlockSpec((1, H, W, C), lambda n: (n, 0, 0, 0)),
            pl.BlockSpec((C, E), lambda n: (0, 0)),
            pl.BlockSpec((1, E), lambda n: (0, 0)),
            pl.BlockSpec((9, E), lambda n: (0, 0)),
            pl.BlockSpec((1, E), lambda n: (0, 0)),
            pl.BlockSpec((E, C), lambda n: (0, 0)),
            pl.BlockSpec((1, C), lambda n: (0, 0)),
        ],
        out_specs=pl.BlockSpec((1, H, W, C), lambda n: (n, 0, 0, 0)),
        scratch_shapes=[pltpu.VMEM((H + 2, W, E), jnp.float32)],
        compiler_params=pltpu.CompilerParams(
            dimension_semantics=("parallel",),
            vmem_limit_bytes=32 * 1024 * 1024,
        ),
    )(x,
      params["w1_bf16"], params["b1"].reshape(1, E),
      params["w2_9E"], params["b2"].reshape(1, E),
      params["w3_bf16"], params["b3"].reshape(1, C))

    return jnp.transpose(out, (0, 3, 1, 2))          # NHWC -> NCHW


# ------------------------- parameters (BN folded) ---------------------------

def _fold_bn(w, b, gamma, beta, mean, var):
    """Fold eval-mode BatchNorm into the preceding conv (out-channel = last axis of w)."""
    scale = gamma / jnp.sqrt(var + BN_EPS)
    shape = [1] * (w.ndim - 1) + [w.shape[-1]]
    return w * scale.reshape(shape), (b - mean) * scale + beta


def make_mbconv_params(dim, expand_ratio, key):
    E = dim * expand_ratio
    keys = iter(jax.random.split(key, 18))

    def normal(shape, s):
        return s * jax.random.normal(next(keys), shape, jnp.float32)

    def bn_stats(c):
        gamma = jax.random.uniform(next(keys), (c,), jnp.float32, 0.5, 1.5)
        beta = 0.05 * jax.random.normal(next(keys), (c,), jnp.float32)
        mean = 0.05 * jax.random.normal(next(keys), (c,), jnp.float32)
        var = jax.random.uniform(next(keys), (c,), jnp.float32, 0.5, 1.5)
        return gamma, beta, mean, var

    w1, b1 = _fold_bn(normal((dim, E), 0.1), normal((E,), 0.02), *bn_stats(E))
    w2, b2 = _fold_bn(normal((3, 3, E), 0.1), normal((E,), 0.02), *bn_stats(E))
    w3, b3 = _fold_bn(normal((E, dim), 0.1), normal((dim,), 0.02), *bn_stats(dim))

    return {
        "w1_f32": w1, "w3_f32": w3,                  # f32 copies for the reference
        "w1_bf16": w1.astype(jnp.bfloat16),
        "w3_bf16": w3.astype(jnp.bfloat16),
        "w2_9E": w2.reshape(9, E),
        "b1": b1, "b2": b2, "b3": b3,
    }


# ------------------------- plain-JAX reference (f32) ------------------------

def mbconv_reference(params, x_nchw):
    # Matches the PyTorch module: exact (erf) GELU, f32 everywhere.
    x = jnp.transpose(x_nchw, (0, 2, 3, 1)).astype(jnp.float32)
    N, H, W, C = x.shape
    h = jax.nn.gelu(jnp.einsum("nhwc,ce->nhwe", x, params["w1_f32"]) + params["b1"],
                    approximate=False)
    hp = jnp.pad(h, ((0, 0), (1, 1), (1, 1), (0, 0)))
    w2 = params["w2_9E"].reshape(3, 3, -1)
    acc = jnp.zeros_like(h)
    for dy in range(3):
        for dx in range(3):
            acc = acc + hp[:, dy:dy + H, dx:dx + W, :] * w2[dy, dx]
    h = jax.nn.gelu(acc + params["b2"], approximate=False)
    out = jnp.einsum("nhwe,ec->nhwc", h, params["w3_f32"]) + params["b3"] + x
    return jnp.transpose(out, (0, 3, 1, 2))


# ---------------------------------- main ------------------------------------

if __name__ == "__main__":
    dim = 32          # expanded width = 4*dim = 128 -> lane-dense intermediates
    N, H, W = 2, 16, 16

    root = jax.random.PRNGKey(0)
    kx, kp = jax.random.split(root)
    params = make_mbconv_params(dim, expand_ratio=4, key=kp)
    x = jax.random.normal(kx, (N, dim, H, W), jnp.float32)       # NCHW, like torch

    fwd = jax.jit(mbconv_block_forward)
    out = fwd(params, x)
    jax.block_until_ready(out)

    ref = mbconv_reference(params, x)
    assert out.shape == (N, dim, H, W) and out.dtype == jnp.float32
    # bf16 MXU inputs (f32 accumulation) + tanh-approx GELU => small drift
    # vs the exact-erf f32 reference.
    max_err = float(jnp.max(jnp.abs(out - ref)))
    assert max_err < 5e-2, f"max abs error vs reference: {max_err}"
    print("KERNEL_OK")
</pallas_src>

<mosaic_0001>
module attributes {stable_mosaic.version = 11 : i64} {
  func.func @_mbconv_kernel(%arg0: i32, %arg1: memref<1x16x16x32xf32, #tpu.memory_space<vmem>>, %arg2: memref<32x128xbf16, #tpu.memory_space<vmem>>, %arg3: memref<1x128xf32, #tpu.memory_space<vmem>>, %arg4: memref<9x128xf32, #tpu.memory_space<vmem>>, %arg5: memref<1x128xf32, #tpu.memory_space<vmem>>, %arg6: memref<128x32xbf16, #tpu.memory_space<vmem>>, %arg7: memref<1x32xf32, #tpu.memory_space<vmem>>, %arg8: memref<1x16x16x32xf32, #tpu.memory_space<vmem>>, %arg9: memref<18x16x128xf32, #tpu.memory_space<vmem>>) attributes {dimension_semantics = [#tpu.dimension_semantics<parallel>], iteration_bounds = array<i64: 2>, scalar_prefetch = 0 : i64, scratch_operands = 1 : i64, tpu.core_type = #tpu.core_type<tc>, window_params = [{transform_indices = @transform_0, window_bounds = array<i64: 1, 16, 16, 32>}, {pipeline_mode = #tpu.pipeline_mode<synchronous>, transform_indices = @transform_1, window_bounds = array<i64: 32, 128>}, {pipeline_mode = #tpu.pipeline_mode<synchronous>, transform_indices = @transform_2, window_bounds = array<i64: 1, 128>}, {pipeline_mode = #tpu.pipeline_mode<synchronous>, transform_indices = @transform_3, window_bounds = array<i64: 9, 128>}, {pipeline_mode = #tpu.pipeline_mode<synchronous>, transform_indices = @transform_4, window_bounds = array<i64: 1, 128>}, {pipeline_mode = #tpu.pipeline_mode<synchronous>, transform_indices = @transform_5, window_bounds = array<i64: 128, 32>}, {pipeline_mode = #tpu.pipeline_mode<synchronous>, transform_indices = @transform_6, window_bounds = array<i64: 1, 32>}, {transform_indices = @transform_7, window_bounds = array<i64: 1, 16, 16, 32>}]} {
    %c0 = arith.constant 0 : index
    %c0_0 = arith.constant 0 : index
    %c0_1 = arith.constant 0 : index
    %c0_2 = arith.constant 0 : index
    %0 = vector.load %arg1[%c0, %c0_0, %c0_1, %c0_2] : memref<1x16x16x32xf32, #tpu.memory_space<vmem>>, vector<1x16x16x32xf32>
    %1 = vector.shape_cast %0 : vector<1x16x16x32xf32> to vector<256x32xf32>
    %2 = arith.truncf %1 : vector<256x32xf32> to vector<256x32xbf16>
    %c0_3 = arith.constant 0 : index
    %c0_4 = arith.constant 0 : index
    %3 = vector.load %arg2[%c0_3, %c0_4] : memref<32x128xbf16, #tpu.memory_space<vmem>>, vector<32x128xbf16>
    %cst = arith.constant dense<0.000000e+00> : vector<256x128xf32>
    %4 = tpu.matmul %2, %3, %cst {dimension_numbers = #tpu.dot_dimension_numbers<[1], [0], [0], [1], [0, 0, 1, 1], [], []>} : vector<256x32xbf16>, vector<32x128xbf16>, vector<256x128xf32> -> vector<256x128xf32>
    %c0_5 = arith.constant 0 : index
    %c0_6 = arith.constant 0 : index
    %5 = vector.load %arg3[%c0_5, %c0_6] : memref<1x128xf32, #tpu.memory_space<vmem>>, vector<1x128xf32>
    %6 = vector.broadcast %5 : vector<1x128xf32> to vector<256x128xf32>
    %7 = arith.addf %4, %6 : vector<256x128xf32>
    %cst_7 = arith.constant 5.000000e-01 : f32
    %8 = vector.broadcast %cst_7 : f32 to vector<256x128xf32>
    %9 = arith.mulf %8, %7 : vector<256x128xf32>
    %10 = arith.mulf %7, %7 : vector<256x128xf32>
    %11 = arith.mulf %10, %7 : vector<256x128xf32>
    %cst_8 = arith.constant 4.471500e-02 : f32
    %12 = vector.broadcast %cst_8 : f32 to vector<256x128xf32>
    %13 = arith.mulf %12, %11 : vector<256x128xf32>
    %14 = arith.addf %7, %13 : vector<256x128xf32>
    %cst_9 = arith.constant 0.797884583 : f32
    %15 = vector.broadcast %cst_9 : f32 to vector<256x128xf32>
    %16 = arith.mulf %15, %14 : vector<256x128xf32>
    %17 = math.tanh %16 : vector<256x128xf32>
    %cst_10 = arith.constant 1.000000e+00 : f32
    %18 = vector.broadcast %cst_10 : f32 to vector<256x128xf32>
    %19 = arith.addf %18, %17 : vector<256x128xf32>
    %20 = arith.mulf %9, %19 : vector<256x128xf32>
    %cst_11 = arith.constant 0.000000e+00 : f32
    %21 = vector.broadcast %cst_11 : f32 to vector<16x128xf32>
    %c0_12 = arith.constant 0 : index
    %c0_13 = arith.constant 0 : index
    %c0_14 = arith.constant 0 : index
    %22 = vector.load %arg9[%c0_12, %c0_13, %c0_14] : memref<18x16x128xf32, #tpu.memory_space<vmem>>, vector<1x16x128xf32>
    %23 = vector.shape_cast %22 : vector<1x16x128xf32> to vector<16x128xf32>
    %24 = vector.shape_cast %21 : vector<16x128xf32> to vector<1x16x128xf32>
    tpu.vector_store %arg9[%c0_12, %c0_13, %c0_14], %24 {strides = array<i32>} : memref<18x16x128xf32, #tpu.memory_space<vmem>>, vector<1x16x128xf32>,
    %cst_15 = arith.constant 0.000000e+00 : f32
    %25 = vector.broadcast %cst_15 : f32 to vector<16x128xf32>
    %c17 = arith.constant 17 : index
    %c0_16 = arith.constant 0 : index
    %c0_17 = arith.constant 0 : index
    %26 = vector.load %arg9[%c17, %c0_16, %c0_17] : memref<18x16x128xf32, #tpu.memory_space<vmem>>, vector<1x16x128xf32>
    %27 = vector.shape_cast %26 : vector<1x16x128xf32> to vector<16x128xf32>
    %28 = vector.shape_cast %25 : vector<16x128xf32> to vector<1x16x128xf32>
    tpu.vector_store %arg9[%c17, %c0_16, %c0_17], %28 {strides = array<i32>} : memref<18x16x128xf32, #tpu.memory_space<vmem>>, vector<1x16x128xf32>,
    %29 = vector.shape_cast %20 : vector<256x128xf32> to vector<16x16x128xf32>
    %c1 = arith.constant 1 : index
    %c0_18 = arith.constant 0 : index
    %c0_19 = arith.constant 0 : index
    %30 = vector.load %arg9[%c1, %c0_18, %c0_19] : memref<18x16x128xf32, #tpu.memory_space<vmem>>, vector<16x16x128xf32>
    tpu.vector_store %arg9[%c1, %c0_18, %c0_19], %29 {strides = array<i32>} : memref<18x16x128xf32, #tpu.memory_space<vmem>>, vector<16x16x128xf32>,
    %c0_20 = arith.constant 0 : index
    %c0_21 = arith.constant 0 : index
    %31 = vector.load %arg4[%c0_20, %c0_21] : memref<9x128xf32, #tpu.memory_space<vmem>>, vector<9x128xf32>
    %32 = tpu.iota {dimensions = array<i32: 0>} : vector<16x1xi32>
    %c0_22 = arith.constant 0 : index
    %c0_23 = arith.constant 0 : index
    %c0_24 = arith.constant 0 : index
    %33 = vector.load %arg9[%c0_22, %c0_23, %c0_24] : memref<18x16x128xf32, #tpu.memory_space<vmem>>, vector<16x16x128xf32>
    %34 = vector.extract_strided_slice %31 {offsets = [1, 0], sizes = [1, 128], strides = [1, 1]} : vector<9x128xf32> to vector<1x128xf32>
    %35 = vector.shape_cast %34 : vector<1x128xf32> to vector<128xf32>
    %36 = vector.shape_cast %35 : vector<128xf32> to vector<1x1x128xf32>
    %37 = vector.broadcast %36 : vector<1x1x128xf32> to vector<16x16x128xf32>
    %38 = arith.mulf %33, %37 : vector<16x16x128xf32>
    %c1_25 = arith.constant 1 : index
    %c0_26 = arith.constant 0 : index
    %c0_27 = arith.constant 0 : index
    %39 = vector.load %arg9[%c1_25, %c0_26, %c0_27] : memref<18x16x128xf32, #tpu.memory_space<vmem>>, vector<16x16x128xf32>
    %40 = vector.extract_strided_slice %31 {offsets = [4, 0], sizes = [1, 128], strides = [1, 1]} : vector<9x128xf32> to vector<1x128xf32>
    %41 = vector.shape_cast %40 : vector<1x128xf32> to vector<128xf32>
    %42 = vector.shape_cast %41 : vector<128xf32> to vector<1x1x128xf32>
    %43 = vector.broadcast %42 : vector<1x1x128xf32> to vector<16x16x128xf32>
    %44 = arith.mulf %39, %43 : vector<16x16x128xf32>
    %45 = arith.addf %38, %44 : vector<16x16x128xf32>
    %c2 = arith.constant 2 : index
    %c0_28 = arith.constant 0 : index
    %c0_29 = arith.constant 0 : index
    %46 = vector.load %arg9[%c2, %c0_28, %c0_29] : memref<18x16x128xf32, #tpu.memory_space<vmem>>, vector<16x16x128xf32>
    %47 = vector.extract_strided_slice %31 {offsets = [7, 0], sizes = [1, 128], strides = [1, 1]} : vector<9x128xf32> to vector<1x128xf32>
    %48 = vector.shape_cast %47 : vector<1x128xf32> to vector<128xf32>
    %49 = vector.shape_cast %48 : vector<128xf32> to vector<1x1x128xf32>
    %50 = vector.broadcast %49 : vector<1x1x128xf32> to vector<16x16x128xf32>
    %51 = arith.mulf %46, %50 : vector<16x16x128xf32>
    %52 = arith.addf %45, %51 : vector<16x16x128xf32>
    %c0_30 = arith.constant 0 : index
    %c0_31 = arith.constant 0 : index
    %c0_32 = arith.constant 0 : index
    %53 = vector.load %arg9[%c0_30, %c0_31, %c0_32] : memref<18x16x128xf32, #tpu.memory_space<vmem>>, vector<16x16x128xf32>
    %54 = vector.extract_strided_slice %31 {offsets = [2, 0], sizes = [1, 128], strides = [1, 1]} : vector<9x128xf32> to vector<1x128xf32>
    %55 = vector.shape_cast %54 : vector<1x128xf32> to vector<128xf32>
    %56 = vector.shape_cast %55 : vector<128xf32> to vector<1x1x128xf32>
    %57 = vector.broadcast %56 : vector<1x1x128xf32> to vector<16x16x128xf32>
    %58 = arith.mulf %53, %57 : vector<16x16x128xf32>
    %c1_33 = arith.constant 1 : index
    %c0_34 = arith.constant 0 : index
    %c0_35 = arith.constant 0 : index
    %59 = vector.load %arg9[%c1_33, %c0_34, %c0_35] : memref<18x16x128xf32, #tpu.memory_space<vmem>>, vector<16x16x128xf32>
    %60 = vector.extract_strided_slice %31 {offsets = [5, 0], sizes = [1, 128], strides = [1, 1]} : vector<9x128xf32> to vector<1x128xf32>
    %61 = vector.shape_cast %60 : vector<1x128xf32> to vector<128xf32>
    %62 = vector.shape_cast %61 : vector<128xf32> to vector<1x1x128xf32>
    %63 = vector.broadcast %62 : vector<1x1x128xf32> to vector<16x16x128xf32>
    %64 = arith.mulf %59, %63 : vector<16x16x128xf32>
    %65 = arith.addf %58, %64 : vector<16x16x128xf32>
    %c2_36 = arith.constant 2 : index
    %c0_37 = arith.constant 0 : index
    %c0_38 = arith.constant 0 : index
    %66 = vector.load %arg9[%c2_36, %c0_37, %c0_38] : memref<18x16x128xf32, #tpu.memory_space<vmem>>, vector<16x16x128xf32>
    %67 = vector.extract_strided_slice %31 {offsets = [8, 0], sizes = [1, 128], strides = [1, 1]} : vector<9x128xf32> to vector<1x128xf32>
    %68 = vector.shape_cast %67 : vector<1x128xf32> to vector<128xf32>
    %69 = vector.shape_cast %68 : vector<128xf32> to vector<1x1x128xf32>
    %70 = vector.broadcast %69 : vector<1x1x128xf32> to vector<16x16x128xf32>
    %71 = arith.mulf %66, %70 : vector<16x16x128xf32>
    %72 = arith.addf %65, %71 : vector<16x16x128xf32>
    %c15_i32 = arith.constant 15 : i32
    %73 = tpu.dynamic_rotate %72 by %c15_i32 dim 1 : vector<16x16x128xf32>, i32 -> vector<16x16x128xf32>
    %c15_i32_39 = arith.constant 15 : i32
    %74 = vector.broadcast %c15_i32_39 : i32 to vector<16x1xi32>
    %75 = arith.cmpi slt, %32, %74 : vector<16x1xi32>
    %cst_40 = arith.constant 0.000000e+00 : f32
    %76 = vector.shape_cast %75 : vector<16x1xi1> to vector<1x16x1xi1>
    %77 = vector.broadcast %76 : vector<1x16x1xi1> to vector<16x16x128xi1>
    %78 = vector.broadcast %cst_40 : f32 to vector<16x16x128xf32>
    %79 = arith.select %77, %73, %78 : vector<16x16x128xi1>, vector<16x16x128xf32>
    %80 = arith.addf %52, %79 : vector<16x16x128xf32>
    %c0_41 = arith.constant 0 : index
    %c0_42 = arith.constant 0 : index
    %c0_43 = arith.constant 0 : index
    %81 = vector.load %arg9[%c0_41, %c0_42, %c0_43] : memref<18x16x128xf32, #tpu.memory_space<vmem>>, vector<16x16x128xf32>
    %82 = vector.extract_strided_slice %31 {offsets = [0, 0], sizes = [1, 128], strides = [1, 1]} : vector<9x128xf32> to vector<1x128xf32>
    %83 = vector.shape_cast %82 : vector<1x128xf32> to vector<128xf32>
    %84 = vector.shape_cast %83 : vector<128xf32> to vector<1x1x128xf32>
    %85 = vector.broadcast %84 : vector<1x1x128xf32> to vector<16x16x128xf32>
    %86 = arith.mulf %81, %85 : vector<16x16x128xf32>
    %c1_44 = arith.constant 1 : index
    %c0_45 = arith.constant 0 : index
    %c0_46 = arith.constant 0 : index
    %87 = vector.load %arg9[%c1_44, %c0_45, %c0_46] : memref<18x16x128xf32, #tpu.memory_space<vmem>>, vector<16x16x128xf32>
    %88 = vector.extract_strided_slice %31 {offsets = [3, 0], sizes = [1, 128], strides = [1, 1]} : vector<9x128xf32> to vector<1x128xf32>
    %89 = vector.shape_cast %88 : vector<1x128xf32> to vector<128xf32>
    %90 = vector.shape_cast %89 : vector<128xf32> to vector<1x1x128xf32>
    %91 = vector.broadcast %90 : vector<1x1x128xf32> to vector<16x16x128xf32>
    %92 = arith.mulf %87, %91 : vector<16x16x128xf32>
    %93 = arith.addf %86, %92 : vector<16x16x128xf32>
    %c2_47 = arith.constant 2 : index
    %c0_48 = arith.constant 0 : index
    %c0_49 = arith.constant 0 : index
    %94 = vector.load %arg9[%c2_47, %c0_48, %c0_49] : memref<18x16x128xf32, #tpu.memory_space<vmem>>, vector<16x16x128xf32>
    %95 = vector.extract_strided_slice %31 {offsets = [6, 0], sizes = [1, 128], strides = [1, 1]} : vector<9x128xf32> to vector<1x128xf32>
    %96 = vector.shape_cast %95 : vector<1x128xf32> to vector<128xf32>
    %97 = vector.shape_cast %96 : vector<128xf32> to vector<1x1x128xf32>
    %98 = vector.broadcast %97 : vector<1x1x128xf32> to vector<16x16x128xf32>
    %99 = arith.mulf %94, %98 : vector<16x16x128xf32>
    %100 = arith.addf %93, %99 : vector<16x16x128xf32>
    %c1_i32 = arith.constant 1 : i32
    %101 = tpu.dynamic_rotate %100 by %c1_i32 dim 1 : vector<16x16x128xf32>, i32 -> vector<16x16x128xf32>
    %c0_i32 = arith.constant 0 : i32
    %102 = vector.broadcast %c0_i32 : i32 to vector<16x1xi32>
    %103 = arith.cmpi sgt, %32, %102 : vector<16x1xi32>
    %cst_50 = arith.constant 0.000000e+00 : f32
    %104 = vector.shape_cast %103 : vector<16x1xi1> to vector<1x16x1xi1>
    %105 = vector.broadcast %104 : vector<1x16x1xi1> to vector<16x16x128xi1>
    %106 = vector.broadcast %cst_50 : f32 to vector<16x16x128xf32>
    %107 = arith.select %105, %101, %106 : vector<16x16x128xi1>, vector<16x16x128xf32>
    %108 = arith.addf %80, %107 : vector<16x16x128xf32>
    %c0_51 = arith.constant 0 : index
    %c0_52 = arith.constant 0 : index
    %109 = vector.load %arg5[%c0_51, %c0_52] : memref<1x128xf32, #tpu.memory_space<vmem>>, vector<1x128xf32>
    %110 = vector.shape_cast %109 : vector<1x128xf32> to vector<1x1x128xf32>
    %111 = vector.broadcast %110 : vector<1x1x128xf32> to vector<16x16x128xf32>
    %112 = arith.addf %108, %111 : vector<16x16x128xf32>
    %cst_53 = arith.constant 5.000000e-01 : f32
    %113 = vector.broadcast %cst_53 : f32 to vector<16x16x128xf32>
    %114 = arith.mulf %113, %112 : vector<16x16x128xf32>
    %115 = arith.mulf %112, %112 : vector<16x16x128xf32>
    %116 = arith.mulf %115, %112 : vector<16x16x128xf32>
    %cst_54 = arith.constant 4.471500e-02 : f32
    %117 = vector.broadcast %cst_54 : f32 to vector<16x16x128xf32>
    %118 = arith.mulf %117, %116 : vector<16x16x128xf32>
    %119 = arith.addf %112, %118 : vector<16x16x128xf32>
    %cst_55 = arith.constant 0.797884583 : f32
    %120 = vector.broadcast %cst_55 : f32 to vector<16x16x128xf32>
    %121 = arith.mulf %120, %119 : vector<16x16x128xf32>
    %122 = math.tanh %121 : vector<16x16x128xf32>
    %cst_56 = arith.constant 1.000000e+00 : f32
    %123 = vector.broadcast %cst_56 : f32 to vector<16x16x128xf32>
    %124 = arith.addf %123, %122 : vector<16x16x128xf32>
    %125 = arith.mulf %114, %124 : vector<16x16x128xf32>
    %126 = vector.shape_cast %125 : vector<16x16x128xf32> to vector<256x128xf32>
    %127 = arith.truncf %126 : vector<256x128xf32> to vector<256x128xbf16>
    %c0_57 = arith.constant 0 : index
    %c0_58 = arith.constant 0 : index
    %128 = vector.load %arg6[%c0_57, %c0_58] : memref<128x32xbf16, #tpu.memory_space<vmem>>, vector<128x32xbf16>
    %cst_59 = arith.constant dense<0.000000e+00> : vector<256x32xf32>
    %129 = tpu.matmul %127, %128, %cst_59 {dimension_numbers = #tpu.dot_dimension_numbers<[1], [0], [0], [1], [0, 0, 1, 1], [], []>} : vector<256x128xbf16>, vector<128x32xbf16>, vector<256x32xf32> -> vector<256x32xf32>
    %c0_60 = arith.constant 0 : index
    %c0_61 = arith.constant 0 : index
    %130 = vector.load %arg7[%c0_60, %c0_61] : memref<1x32xf32, #tpu.memory_space<vmem>>, vector<1x32xf32>
    %131 = vector.broadcast %130 : vector<1x32xf32> to vector<256x32xf32>
    %132 = arith.addf %129, %131 : vector<256x32xf32>
    %c0_62 = arith.constant 0 : index
    %c0_63 = arith.constant 0 : index
    %c0_64 = arith.constant 0 : index
    %c0_65 = arith.constant 0 : index
    %133 = vector.load %arg1[%c0_62, %c0_63, %c0_64, %c0_65] : memref<1x16x16x32xf32, #tpu.memory_space<vmem>>, vector<1x16x16x32xf32>
    %134 = vector.shape_cast %133 : vector<1x16x16x32xf32> to vector<256x32xf32>
    %135 = arith.addf %132, %134 : vector<256x32xf32>
    %136 = vector.shape_cast %135 : vector<256x32xf32> to vector<1x16x16x32xf32>
    %c0_66 = arith.constant 0 : index
    %c0_67 = arith.constant 0 : index
    %c0_68 = arith.constant 0 : index
    %c0_69 = arith.constant 0 : index
    %137 = vector.load %arg8[%c0_66, %c0_67, %c0_68, %c0_69] : memref<1x16x16x32xf32, #tpu.memory_space<vmem>>, vector<1x16x16x32xf32>
    tpu.vector_store %arg8[%c0_66, %c0_67, %c0_68, %c0_69], %136 {strides = array<i32>} : memref<1x16x16x32xf32, #tpu.memory_space<vmem>>, vector<1x16x16x32xf32>,
    return
  }
  func.func @transform_0(%arg0: i32) -> (i32, i32, i32, i32) {
    %c0_i32 = arith.constant 0 : i32
    %c0_i32_0 = arith.constant 0 : i32
    %c0_i32_1 = arith.constant 0 : i32
    %c0_i32_2 = arith.constant 0 : i32
    return %arg0, %c0_i32, %c0_i32_0, %c0_i32_1 : i32, i32, i32, i32
  }
  func.func @transform_1(%arg0: i32) -> (i32, i32) {
    %c0_i32 = arith.constant 0 : i32
    %c0_i32_0 = arith.constant 0 : i32
    %c0_i32_1 = arith.constant 0 : i32
    return %c0_i32, %c0_i32_0 : i32, i32
  }
  func.func @transform_2(%arg0: i32) -> (i32, i32) {
    %c0_i32 = arith.constant 0 : i32
    %c0_i32_0 = arith.constant 0 : i32
    %c0_i32_1 = arith.constant 0 : i32
    return %c0_i32, %c0_i32_0 : i32, i32
  }
  func.func @transform_3(%arg0: i32) -> (i32, i32) {
    %c0_i32 = arith.constant 0 : i32
    %c0_i32_0 = arith.constant 0 : i32
    %c0_i32_1 = arith.constant 0 : i32
    return %c0_i32, %c0_i32_0 : i32, i32
  }
  func.func @transform_4(%arg0: i32) -> (i32, i32) {
    %c0_i32 = arith.constant 0 : i32
    %c0_i32_0 = arith.constant 0 : i32
    %c0_i32_1 = arith.constant 0 : i32
    return %c0_i32, %c0_i32_0 : i32, i32
  }
  func.func @transform_5(%arg0: i32) -> (i32, i32) {
    %c0_i32 = arith.constant 0 : i32
    %c0_i32_0 = arith.constant 0 : i32
    %c0_i32_1 = arith.constant 0 : i32
    return %c0_i32, %c0_i32_0 : i32, i32
  }
  func.func @transform_6(%arg0: i32) -> (i32, i32) {
    %c0_i32 = arith.constant 0 : i32
    %c0_i32_0 = arith.constant 0 : i32
    %c0_i32_1 = arith.constant 0 : i32
    return %c0_i32, %c0_i32_0 : i32, i32
  }
  func.func @transform_7(%arg0: i32) -> (i32, i32, i32, i32) {
    %c0_i32 = arith.constant 0 : i32
    %c0_i32_0 = arith.constant 0 : i32
    %c0_i32_1 = arith.constant 0 : i32
    %c0_i32_2 = arith.constant 0 : i32
    return %arg0, %c0_i32, %c0_i32_0, %c0_i32_1 : i32, i32, i32, i32
  }
}

</mosaic_0001>

<llo_original>
// kernel: mbconv_block_forward.1
$region0: #{mbconv_block_forward.1}
  #allocation0 [shape = 'u32[]', space=smem, size = 0x4, offset = 0x4, fixed_abs, tag = 'smem constant byte address 0x4 - core index']
  #allocation1 [shape = 'u32[72,128]{1,0:T(1,128)}', space=vmem, size = 0x9000, scoped, tag = 'internal scratch']
  #allocation2 [shape = 'f32[18,16,128]{2,1,0:T(8,128)}', space=vmem, size = 0x24000, scoped, tag = 'scratch operand']
  %s0 = inlined_call_operand.hbm [shape: f32[2,16,16,32], index: 0, kind: input, shape index: {}]
  %s1 = inlined_call_operand.vmem [shape: bf16[32,128], index: 1, kind: input, shape index: {}]
  %s2 = inlined_call_operand.vmem [shape: f32[1,128], index: 2, kind: input, shape index: {}]
  %s3 = inlined_call_operand.vmem [shape: f32[9,128], index: 3, kind: input, shape index: {}]
  %s4 = inlined_call_operand.vmem [shape: f32[1,128], index: 4, kind: input, shape index: {}]
  %s5 = inlined_call_operand.vmem [shape: bf16[128,32], index: 5, kind: input, shape index: {}]
  %s6 = inlined_call_operand.vmem [shape: f32[1,32], index: 6, kind: input, shape index: {}]
  %s7 = inlined_call_operand.hbm [shape: f32[2,16,16,32], index: 7, kind: output, shape index: {}]
  %s8 = sld [smem:[#allocation0]]
  $region65: #{mbconv_block_forward.1} parent=0
    _
  %s10 = ssub.s32 1, %s8
  %s11 = scalar_select 0, %s10, %s8
  $region1: #{mbconv_block_forward.1} parent=0
    #allocation3 [shape = 'u8[262144]{0}', space=vmem, size = 0x40000, scoped, tag = 'input window, operand 0']
    #allocation4 [shape = 's32[2]{0}', space=sflag, size = 0x8, scoped, tag = 'scoped memory for mbconv_block_forward.1']
    #allocation5 [shape = 's32[2]{0}', space=sflag, size = 0x8, scoped, tag = 'scoped memory for mbconv_block_forward.1']
    #allocation6 [shape = 'u8[262144]{0}', space=vmem, size = 0x40000, scoped, tag = 'output window, operand 0']
    %12 = vsyncpa [#allocation4], 0
    %s13 = scalar_lea.sflag [#allocation4], 1
    %14 = vsyncpa %s13, 0
    %15 = vsyncpa [#allocation5], 0
    %s16 = scalar_lea.sflag [#allocation5], 1
    %17 = vsyncpa %s16, 0
    loop: start=0, step=1, limit=4
    $region2: #{mbconv_block_forward.1} parent=1 // loop_pre_header
      _
    $region3: #{mbconv_block_forward.1} parent=1 // loop_header
      %s19 = sphi 0, %s23
      %p20 = scmp.ge.s32.totalorder %s19, 4
      %s29 = sphi 0, %s31
      %s32 = sphi 0, %s29
      %s33 = sphi 0, %s32
      %s49 = sphi 0, %s33
      %s53 = sphi 0, %s53
      %s55 = sphi 0, %s53
      %s56 = sphi 0, %s55
      %s70 = sphi 0, %s56
      %s74 = sphi 0, %s74
      %s76 = sphi 0, %s74
      %s77 = sphi 0, %s76
      %s91 = sphi 0, %s77
      %s95 = sphi 0, %s95
      %s97 = sphi 0, %s95
      %s98 = sphi 0, %s97
      %s112 = sphi 0, %s98
      %s116 = sphi 0, %s116
      %s118 = sphi 0, %s116
      %s119 = sphi 0, %s118
      %s133 = sphi 0, %s119
      %s137 = sphi 0, %s137
      %s139 = sphi 0, %s137
      %s140 = sphi 0, %s139
      %s154 = sphi 0, %s140
      %s158 = sphi 0, %s158
      %s160 = sphi 0, %s158
      %s161 = sphi 0, %s160
      %s175 = sphi 0, %s161
      %s181 = sphi 0, %s183
      %s184 = sphi 0, %s181
      %s185 = sphi 0, %s184
      %s201 = sphi 0, %s185
    $region4: #{mbconv_block_forward.1} parent=1 // loop_header_branch
      %22 = sbr.rel (%p20) target = $region8
    $region5: #{mbconv_block_forward.1} parent=1 // loop_body
      %s24 = ssub.s32 %s19, 1
      %s25 = ssub.s32 %s19, 2
      %s26 = sadd.s32 %s19, 1
      %s27 = ssub.s32 %s19, %s26
      %p28 = scmp.eq.s32.totalorder %s27, 0
      %s30 = sadd.s32 %s29, 1
      %s31 = scalar_select %p28, %s29, %s30
      %p34 = pneg %p28
      %p35 = scmp.eq.s32.totalorder %s19, 1
      %p36 = por %p34, %p35
      %p37 = scmp.ne.s32.totalorder %s29, %s32
      %p38 = scmp.eq.s32.totalorder %s19, 0
      %p39 = por %p37, %p38
      %p40 = scmp.ne.s32.totalorder %s29, %s32
      %p41 = scmp.eq.s32.totalorder %s24, 1
      %p42 = por %p40, %p41
      %p43 = scmp.ne.s32.totalorder %s32, %s33
      %p44 = scmp.eq.s32.totalorder %s24, 0
      %p45 = por %p43, %p44
      %p46 = scmp.ne.s32.totalorder %s32, %s33
      %p47 = scmp.eq.s32.totalorder %s25, 1
      %p48 = por %p46, %p47
      %p50 = scmp.ne.s32.totalorder %s33, %s49
      %p51 = scmp.eq.s32.totalorder %s25, 0
      %p52 = por %p50, %p51
      %s54 = sadd.s32 %s53, 1
      %p57 = scmp.eq.s32.totalorder %s19, 1
      %p58 = scmp.ne.s32.totalorder %s53, %s55
      %p59 = scmp.eq.s32.totalorder %s19, 0
      %p60 = por %p58, %p59
      %p61 = scmp.ne.s32.totalorder %s53, %s55
      %p62 = scmp.eq.s32.totalorder %s24, 1
      %p63 = por %p61, %p62
      %p64 = scmp.ne.s32.totalorder %s55, %s56
      %p65 = scmp.eq.s32.totalorder %s24, 0
      %p66 = por %p64, %p65
      %p67 = scmp.ne.s32.totalorder %s55, %s56
      %p68 = scmp.eq.s32.totalorder %s25, 1
      %p69 = por %p67, %p68
      %p71 = scmp.ne.s32.totalorder %s56, %s70
      %p72 = scmp.eq.s32.totalorder %s25, 0
      %p73 = por %p71, %p72
      %s75 = sadd.s32 %s74, 1
      %p78 = scmp.eq.s32.totalorder %s19, 1
      %p79 = scmp.ne.s32.totalorder %s74, %s76
      %p80 = scmp.eq.s32.totalorder %s19, 0
      %p81 = por %p79, %p80
      %p82 = scmp.ne.s32.totalorder %s74, %s76
      %p83 = scmp.eq.s32.totalorder %s24, 1
      %p84 = por %p82, %p83
      %p85 = scmp.ne.s32.totalorder %s76, %s77
      %p86 = scmp.eq.s32.totalorder %s24, 0
      %p87 = por %p85, %p86
      %p88 = scmp.ne.s32.totalorder %s76, %s77
      %p89 = scmp.eq.s32.totalorder %s25, 1
      %p90 = por %p88, %p89
      %p92 = scmp.ne.s32.totalorder %s77, %s91
      %p93 = scmp.eq.s32.totalorder %s25, 0
      %p94 = por %p92, %p93
      %s96 = sadd.s32 %s95, 1
      %p99 = scmp.eq.s32.totalorder %s19, 1
      %p100 = scmp.ne.s32.totalorder %s95, %s97
      %p101 = scmp.eq.s32.totalorder %s19, 0
      %p102 = por %p100, %p101
      %p103 = scmp.ne.s32.totalorder %s95, %s97
      %p104 = scmp.eq.s32.totalorder %s24, 1
      %p105 = por %p103, %p104
      %p106 = scmp.ne.s32.totalorder %s97, %s98
      %p107 = scmp.eq.s32.totalorder %s24, 0
      %p108 = por %p106, %p107
      %p109 = scmp.ne.s32.totalorder %s97, %s98
      %p110 = scmp.eq.s32.totalorder %s25, 1
      %p111 = por %p109, %p110
      %p113 = scmp.ne.s32.totalorder %s98, %s112
      %p114 = scmp.eq.s32.totalorder %s25, 0
      %p115 = por %p113, %p114
      %s117 = sadd.s32 %s116, 1
      %p120 = scmp.eq.s32.totalorder %s19, 1
      %p121 = scmp.ne.s32.totalorder %s116, %s118
      %p122 = scmp.eq.s32.totalorder %s19, 0
      %p123 = por %p121, %p122
      %p124 = scmp.ne.s32.totalorder %s116, %s118
      %p125 = scmp.eq.s32.totalorder %s24, 1
      %p126 = por %p124, %p125
      %p127 = scmp.ne.s32.totalorder %s118, %s119
      %p128 = scmp.eq.s32.totalorder %s24, 0
      %p129 = por %p127, %p128
      %p130 = scmp.ne.s32.totalorder %s118, %s119
      %p131 = scmp.eq.s32.totalorder %s25, 1
      %p132 = por %p130, %p131
      %p134 = scmp.ne.s32.totalorder %s119, %s133
      %p135 = scmp.eq.s32.totalorder %s25, 0
      %p136 = por %p134, %p135
      %s138 = sadd.s32 %s137, 1
      %p141 = scmp.eq.s32.totalorder %s19, 1
      %p142 = scmp.ne.s32.totalorder %s137, %s139
      %p143 = scmp.eq.s32.totalorder %s19, 0
      %p144 = por %p142, %p143
      %p145 = scmp.ne.s32.totalorder %s137, %s139
      %p146 = scmp.eq.s32.totalorder %s24, 1
      %p147 = por %p145, %p146
      %p148 = scmp.ne.s32.totalorder %s139, %s140
      %p149 = scmp.eq.s32.totalorder %s24, 0
      %p150 = por %p148, %p149
      %p151 = scmp.ne.s32.totalorder %s139, %s140
      %p152 = scmp.eq.s32.totalorder %s25, 1
      %p153 = por %p151, %p152
      %p155 = scmp.ne.s32.totalorder %s140, %s154
      %p156 = scmp.eq.s32.totalorder %s25, 0
      %p157 = por %p155, %p156
      %s159 = sadd.s32 %s158, 1
      %p162 = scmp.eq.s32.totalorder %s19, 1
      %p163 = scmp.ne.s32.totalorder %s158, %s160
      %p164 = scmp.eq.s32.totalorder %s19, 0
      %p165 = por %p163, %p164
      %p166 = scmp.ne.s32.totalorder %s158, %s160
      %p167 = scmp.eq.s32.totalorder %s24, 1
      %p168 = por %p166, %p167
      %p169 = scmp.ne.s32.totalorder %s160, %s161
      %p170 = scmp.eq.s32.totalorder %s24, 0
      %p171 = por %p169, %p170
      %p172 = scmp.ne.s32.totalorder %s160, %s161
      %p173 = scmp.eq.s32.totalorder %s25, 1
      %p174 = por %p172, %p173
      %p176 = scmp.ne.s32.totalorder %s161, %s175
      %p177 = scmp.eq.s32.totalorder %s25, 0
      %p178 = por %p176, %p177
      %s179 = ssub.s32 %s19, %s26
      %p180 = scmp.eq.s32.totalorder %s179, 0
      %s182 = sadd.s32 %s181, 1
      %s183 = scalar_select %p180, %s181, %s182
      %p186 = pneg %p180
      %p187 = scmp.eq.s32.totalorder %s19, 1
      %p188 = por %p186, %p187
      %p189 = scmp.ne.s32.totalorder %s181, %s184
      %p190 = scmp.eq.s32.totalorder %s19, 0
      %p191 = por %p189, %p190
      %p192 = scmp.ne.s32.totalorder %s181, %s184
      %p193 = scmp.eq.s32.totalorder %s24, 1
      %p194 = por %p192, %p193
      %p195 = scmp.ne.s32.totalorder %s184, %s185
      %p196 = scmp.eq.s32.totalorder %s24, 0
      %p197 = por %p195, %p196
      %p198 = scmp.ne.s32.totalorder %s184, %s185
      %p199 = scmp.eq.s32.totalorder %s25, 1
      %p200 = por %p198, %p199
      %p202 = scmp.ne.s32.totalorder %s185, %s201
      %p203 = scmp.eq.s32.totalorder %s25, 0
      %p204 = por %p202, %p203
      %p205 = scmp.le.s32.totalorder 1, %s19
      %p206 = scmp.lt.s32.totalorder %s19, 3
      %p207 = pnand %p205, %p206
      %p208 = pneg %p207
      // Predicated region
      $region9: #{mbconv_block_forward.1} parent=5 // pred_check
        _
      $region10: #{mbconv_block_forward.1} parent=5 // pred_check_branch
        %210 = sbr.rel (%p207) target = $region12
      $region11: #{mbconv_block_forward.1} parent=5 // pred_region
        %s211 = ssub.s32 %s19, 1
        // Predicated region
        $region13: #{mbconv_block_forward.1} parent=11 // pred_check
          %p212 = pneg %p66
        $region14: #{mbconv_block_forward.1} parent=11 // pred_check_branch
          %214 = sbr.rel (%p212) target = $region16
        $region15: #{mbconv_block_forward.1} parent=11 // pred_region
          _
        $region16: #{mbconv_block_forward.1} parent=11 // pred_fallthru
          _
        // Predicated region
        $region17: #{mbconv_block_forward.1} parent=11 // pred_check
          %p215 = pneg %p87
        $region18: #{mbconv_block_forward.1} parent=11 // pred_check_branch
          %217 = sbr.rel (%p215) target = $region20
        $region19: #{mbconv_block_forward.1} parent=11 // pred_region
          _
        $region20: #{mbconv_block_forward.1} parent=11 // pred_fallthru
          _
        // Predicated region
        $region21: #{mbconv_block_forward.1} parent=11 // pred_check
          %p218 = pneg %p108
        $region22: #{mbconv_block_forward.1} parent=11 // pred_check_branch
          %220 = sbr.rel (%p218) target = $region24
        $region23: #{mbconv_block_forward.1} parent=11 // pred_region
          _
        $region24: #{mbconv_block_forward.1} parent=11 // pred_fallthru
          _
        // Predicated region
        $region25: #{mbconv_block_forward.1} parent=11 // pred_check
          %p221 = pneg %p129
        $region26: #{mbconv_block_forward.1} parent=11 // pred_check_branch
          %223 = sbr.rel (%p221) target = $region28
        $region27: #{mbconv_block_forward.1} parent=11 // pred_region
          _
        $region28: #{mbconv_block_forward.1} parent=11 // pred_fallthru
          _
        // Predicated region
        $region29: #{mbconv_block_forward.1} parent=11 // pred_check
          %p224 = pneg %p150
        $region30: #{mbconv_block_forward.1} parent=11 // pred_check_branch
          %226 = sbr.rel (%p224) target = $region32
        $region31: #{mbconv_block_forward.1} parent=11 // pred_region
          _
        $region32: #{mbconv_block_forward.1} parent=11 // pred_fallthru
          _
        // Predicated region
        $region33: #{mbconv_block_forward.1} parent=11 // pred_check
          %p227 = pneg %p171
        $region34: #{mbconv_block_forward.1} parent=11 // pred_check_branch
          %229 = sbr.rel (%p227) target = $region36
        $region35: #{mbconv_block_forward.1} parent=11 // pred_region
          _
        $region36: #{mbconv_block_forward.1} parent=11 // pred_fallthru
          _
      $region12: #{mbconv_block_forward.1} parent=5 // pred_fallthru
        _
      %p230 = scmp.lt.s32.totalorder %s19, 2
      // Predicated region
      $region37: #{mbconv_block_forward.1} parent=5 // pred_check
        %p231 = pneg %p230
      $region38: #{mbconv_block_forward.1} parent=5 // pred_check_branch
        %233 = sbr.rel (%p231) target = $region40
      $region39: #{mbconv_block_forward.1} parent=5 // pred_region
        // Predicated region
        $region41: #{mbconv_block_forward.1} parent=39 // pred_check
          %p234 = pneg %p39
        $region42: #{mbconv_block_forward.1} parent=39 // pred_check_branch
          %236 = sbr.rel (%p234) target = $region44
        $region43: #{mbconv_block_forward.1} parent=39 // pred_region
          %s237 = sand.u32 %s29, 1
          %s238 = scalar_lea.sflag [#allocation4], %s237
          %s239 = sand.u32 %s29, 1
          %s240 = smul.addr %s239, 256
          %s241 = scalar_lea.vmem [#allocation3], %s240
          %243 = vsyncadd %s238, 0
          %s244 = smul.addr %s19, 32
          %s245 = smul.addr %s244, 8
          %s246 = scalar_lea.hbm %s0, %s245
          %s247 = sshll.u32 %s246, 4
          %s248 = int_to_ptr.hbm [resolvable:$true] %s247
          %s249 = sshll.u32 %s241, 4
          %s250 = int_to_ptr.vmem [resolvable:$true] %s249
          %255 = dma.hbm_to_vmem [thread:$0]  %s248, 4096, %s250, %s238, 128, 128, 8
        $region44: #{mbconv_block_forward.1} parent=39 // pred_fallthru
          _
      $region40: #{mbconv_block_forward.1} parent=5 // pred_fallthru
        _
      %p256 = scmp.le.s32.totalorder 1, %s19
      %p257 = scmp.lt.s32.totalorder %s19, 3
      %p258 = pnand %p256, %p257
      %p259 = pneg %p258
      // Predicated region
      $region45: #{mbconv_block_forward.1} parent=5 // pred_check
        _
      $region46: #{mbconv_block_forward.1} parent=5 // pred_check_branch
        %261 = sbr.rel (%p258) target = $region48
      $region47: #{mbconv_block_forward.1} parent=5 // pred_region
        %s262 = ssub.s32 %s19, 1
        %s263 = sand.u32 %s32, 1
        %s264 = scalar_lea.sflag [#allocation4], %s263
        %s265 = sand.u32 %s32, 1
        %s266 = smul.addr %s265, 256
        %s267 = scalar_lea.vmem [#allocation3], %s266
        // Predicated region
        $region49: #{mbconv_block_forward.1} parent=47 // pred_check
          %p268 = pneg %p45
        $region50: #{mbconv_block_forward.1} parent=47 // pred_check_branch
          %270 = sbr.rel (%p268) target = $region52
        $region51: #{mbconv_block_forward.1} parent=47 // pred_region
          %272 = dma.done %s264, 4096
        $region52: #{mbconv_block_forward.1} parent=47 // pred_fallthru
          _
        %s273 = sand.u32 %s32, 1
        %s274 = scalar_lea.sflag [#allocation4], %s273
        %s275 = sand.u32 %s32, 1
        %s276 = smul.addr %s275, 256
        %s277 = scalar_lea.vmem [#allocation3], %s276
        %p278 = pneg %p45
        %p279 = pneg %p42
        %p280 = pneg %p66
        %p281 = pneg %p63
        %p282 = pneg %p87
        %p283 = pneg %p84
        %p284 = pneg %p108
        %p285 = pneg %p105
        %p286 = pneg %p129
        %p287 = pneg %p126
        %p288 = pneg %p150
        %p289 = pneg %p147
        %p290 = pneg %p171
        %p291 = pneg %p168
        %p292 = pneg %p197
        %p293 = pneg %p194
        %s294 = sand.u32 %s184, 1
        %s295 = scalar_lea.sflag [#allocation5], %s294
        %s296 = sand.u32 %s184, 1
        %s297 = smul.addr %s296, 256
        %s298 = scalar_lea.vmem [#allocation6], %s297
        %v300 = vld [vmem:[%s267] sm:$0xff]
        %v301 = vld [vmem:[%s267 + $0x8] sm:$0xff]
        %v302 = vld [vmem:[%s267 + $0x10] sm:$0xff]
        %v303 = vld [vmem:[%s267 + $0x18] sm:$0xff]
        %v304 = vld [vmem:[%s267 + $0x20] sm:$0xff]
        %v305 = vld [vmem:[%s267 + $0x28] sm:$0xff]
        %v306 = vld [vmem:[%s267 + $0x30] sm:$0xff]
        %v307 = vld [vmem:[%s267 + $0x38] sm:$0xff]
        %v308 = vld [vmem:[%s267 + $0x40] sm:$0xff]
        %v309 = vld [vmem:[%s267 + $0x48] sm:$0xff]
        %v310 = vld [vmem:[%s267 + $0x50] sm:$0xff]
        %v311 = vld [vmem:[%s267 + $0x58] sm:$0xff]
        %v312 = vld [vmem:[%s267 + $0x60] sm:$0xff]
        %v313 = vld [vmem:[%s267 + $0x68] sm:$0xff]
        %v314 = vld [vmem:[%s267 + $0x70] sm:$0xff]
        %v315 = vld [vmem:[%s267 + $0x78] sm:$0xff]
        %v316 = vld [vmem:[%s267 + $0x80] sm:$0xff]
        %v317 = vld [vmem:[%s267 + $0x88] sm:$0xff]
        %v318 = vld [vmem:[%s267 + $0x90] sm:$0xff]
        %v319 = vld [vmem:[%s267 + $0x98] sm:$0xff]
        %v320 = vld [vmem:[%s267 + $0xa0] sm:$0xff]
        %v321 = vld [vmem:[%s267 + $0xa8] sm:$0xff]
        %v322 = vld [vmem:[%s267 + $0xb0] sm:$0xff]
        %v323 = vld [vmem:[%s267 + $0xb8] sm:$0xff]
        %v324 = vld [vmem:[%s267 + $0xc0] sm:$0xff]
        %v325 = vld [vmem:[%s267 + $0xc8] sm:$0xff]
        %v326 = vld [vmem:[%s267 + $0xd0] sm:$0xff]
        %v327 = vld [vmem:[%s267 + $0xd8] sm:$0xff]
        %v328 = vld [vmem:[%s267 + $0xe0] sm:$0xff]
        %v329 = vld [vmem:[%s267 + $0xe8] sm:$0xff]
        %v330 = vld [vmem:[%s267 + $0xf0] sm:$0xff]
        %v331 = vld [vmem:[%s267 + $0xf8] sm:$0xff]
        %v332 = vpack.c.bf16 %v301, %v300
        %v333 = vpack.c.bf16 %v303, %v302
        %v334 = vpack.c.bf16 %v305, %v304
        %v335 = vpack.c.bf16 %v307, %v306
        %v336 = vpack.c.bf16 %v309, %v308
        %v337 = vpack.c.bf16 %v311, %v310
        %v338 = vpack.c.bf16 %v313, %v312
        %v339 = vpack.c.bf16 %v315, %v314
        %v340 = vpack.c.bf16 %v317, %v316
        %v341 = vpack.c.bf16 %v319, %v318
        %v342 = vpack.c.bf16 %v321, %v320
        %v343 = vpack.c.bf16 %v323, %v322
        %v344 = vpack.c.bf16 %v325, %v324
        %v345 = vpack.c.bf16 %v327, %v326
        %v346 = vpack.c.bf16 %v329, %v328
        %v347 = vpack.c.bf16 %v331, %v330
        %v348 = vld [vmem:[%s1] sm:$0xf]
        %v349 = vld [vmem:[%s1 + $0x4] sm:$0xf]
        %v350 = vld [vmem:[%s1 + $0x8] sm:$0xf]
        %v351 = vld [vmem:[%s1 + $0xc] sm:$0xf]
        %v352 = vld [vmem:[%s2] sm:$0x1]
        %v354 = vperm.slane %v352, 0
        %v360 = vunpack.c.l.b16 %v348
        %v361 = vunpack.c.l.b16 %v349
        %v362 = vunpack.c.l.b16 %v350
        %v363 = vunpack.c.l.b16 %v351
        %v364 = vpack.c.b16 %v361, %v360
        %v365 = vpack.c.b16 %v363, %v362
        %vm368 = vcmask 261120
        %v370 = vsel %vm368, %v332, 0
        %v373 = vsel %vm368, %v333, 0
        %v376 = vsel %vm368, %v334, 0
        %v379 = vsel %vm368, %v335, 0
        %v382 = vsel %vm368, %v336, 0
        %v385 = vsel %vm368, %v337, 0
        %v388 = vsel %vm368, %v338, 0
        %v391 = vsel %vm368, %v339, 0
        %v394 = vsel %vm368, %v340, 0
        %v397 = vsel %vm368, %v341, 0
        %v400 = vsel %vm368, %v342, 0
        %v403 = vsel %vm368, %v343, 0
        %v406 = vsel %vm368, %v344, 0
        %v409 = vsel %vm368, %v345, 0
        %v412 = vsel %vm368, %v346, 0
        %v415 = vsel %vm368, %v347, 0
        %417 = vmatpush.bf16.msra.mxu0 0
        %418 = vmatpush.bf16.msra.mxu0 0
        %419 = vmatpush.bf16.msra.mxu0 0
        %420 = vmatpush.bf16.msra.mxu0 0
        %421 = vmatpush.bf16.msra.mxu0 0
        %422 = vmatpush.bf16.msra.mxu0 0
        %423 = vmatpush.bf16.msra.mxu0 %v365
        %424 = vmatpush.bf16.msra.mxu0 %v364
        %425 = vmatmul.bf16.gmra.mxu0 %v370
        %v426 = vpop.f32.mrf.mxu0
        %v427 = vadd.f32 %v354, %v426
        %v428 = vpop.f32.mrf.mxu0
        %v429 = vadd.f32 %v354, %v428
        %430 = vmatmul.bf16.gmra.mxu0 %v373
        %v431 = vpop.f32.mrf.mxu0
        %v432 = vadd.f32 %v354, %v431
        %v433 = vpop.f32.mrf.mxu0
        %v434 = vadd.f32 %v354, %v433
        %435 = vmatmul.bf16.gmra.mxu0 %v376
        %v436 = vpop.f32.mrf.mxu0
        %v437 = vadd.f32 %v354, %v436
        %v438 = vpop.f32.mrf.mxu0
        %v439 = vadd.f32 %v354, %v438
        %440 = vmatmul.bf16.gmra.mxu0 %v379
        %v441 = vpop.f32.mrf.mxu0
        %v442 = vadd.f32 %v354, %v441
        %v443 = vpop.f32.mrf.mxu0
        %v444 = vadd.f32 %v354, %v443
        %445 = vmatmul.bf16.gmra.mxu0 %v382
        %v446 = vpop.f32.mrf.mxu0
        %v447 = vadd.f32 %v354, %v446
        %v448 = vpop.f32.mrf.mxu0
        %v449 = vadd.f32 %v354, %v448
        %450 = vmatmul.bf16.gmra.mxu0 %v385
        %v451 = vpop.f32.mrf.mxu0
        %v452 = vadd.f32 %v354, %v451
        %v453 = vpop.f32.mrf.mxu0
        %v454 = vadd.f32 %v354, %v453
        %455 = vmatmul.bf16.gmra.mxu0 %v388
        %v456 = vpop.f32.mrf.mxu0
        %v457 = vadd.f32 %v354, %v456
        %v458 = vpop.f32.mrf.mxu0
        %v459 = vadd.f32 %v354, %v458
        %460 = vmatmul.bf16.gmra.mxu0 %v391
        %v461 = vpop.f32.mrf.mxu0
        %v462 = vadd.f32 %v354, %v461
        %v463 = vpop.f32.mrf.mxu0
        %v464 = vadd.f32 %v354, %v463
        %465 = vmatmul.bf16.gmra.mxu0 %v394
        %v466 = vpop.f32.mrf.mxu0
        %v467 = vadd.f32 %v354, %v466
        %v468 = vpop.f32.mrf.mxu0
        %v469 = vadd.f32 %v354, %v468
        %470 = vmatmul.bf16.gmra.mxu0 %v397
        %v471 = vpop.f32.mrf.mxu0
        %v472 = vadd.f32 %v354, %v471
        %v473 = vpop.f32.mrf.mxu0
        %v474 = vadd.f32 %v354, %v473
        %475 = vmatmul.bf16.gmra.mxu0 %v400
        %v476 = vpop.f32.mrf.mxu0
        %v477 = vadd.f32 %v354, %v476
        %v478 = vpop.f32.mrf.mxu0
        %v479 = vadd.f32 %v354, %v478
        %480 = vmatmul.bf16.gmra.mxu0 %v403
        %v481 = vpop.f32.mrf.mxu0
        %v482 = vadd.f32 %v354, %v481
        %v483 = vpop.f32.mrf.mxu0
        %v484 = vadd.f32 %v354, %v483
        %485 = vmatmul.bf16.gmra.mxu0 %v406
        %v486 = vpop.f32.mrf.mxu0
        %v487 = vadd.f32 %v354, %v486
        %v488 = vpop.f32.mrf.mxu0
        %v489 = vadd.f32 %v354, %v488
        %490 = vmatmul.bf16.gmra.mxu0 %v409
        %v491 = vpop.f32.mrf.mxu0
        %v492 = vadd.f32 %v354, %v491
        %v493 = vpop.f32.mrf.mxu0
        %v494 = vadd.f32 %v354, %v493
        %495 = vmatmul.bf16.gmra.mxu0 %v412
        %v496 = vpop.f32.mrf.mxu0
        %v497 = vadd.f32 %v354, %v496
        %v498 = vpop.f32.mrf.mxu0
        %v499 = vadd.f32 %v354, %v498
        %500 = vmatmul.bf16.gmra.mxu0 %v415
        %v501 = vpop.f32.mrf.mxu0
        %v502 = vadd.f32 %v354, %v501
        %v503 = vpop.f32.mrf.mxu0
        %v504 = vadd.f32 %v354, %v503
        %505 = vdwg.mxu0
        %v506 = vmul.f32 %v427, 0.5
        %v507 = vmul.f32 %v429, 0.5
        %v508 = vmul.f32 %v432, 0.5
        %v509 = vmul.f32 %v434, 0.5
        %v510 = vmul.f32 %v437, 0.5
        %v511 = vmul.f32 %v439, 0.5
        %v512 = vmul.f32 %v442, 0.5
        %v513 = vmul.f32 %v444, 0.5
        %v514 = vmul.f32 %v447, 0.5
        %v515 = vmul.f32 %v449, 0.5
        %v516 = vmul.f32 %v452, 0.5
        %v517 = vmul.f32 %v454, 0.5
        %v518 = vmul.f32 %v457, 0.5
        %v519 = vmul.f32 %v459, 0.5
        %v520 = vmul.f32 %v462, 0.5
        %v521 = vmul.f32 %v464, 0.5
        %v522 = vmul.f32 %v467, 0.5
        %v523 = vmul.f32 %v469, 0.5
        %v524 = vmul.f32 %v472, 0.5
        %v525 = vmul.f32 %v474, 0.5
        %v526 = vmul.f32 %v477, 0.5
        %v527 = vmul.f32 %v479, 0.5
        %v528 = vmul.f32 %v482, 0.5
        %v529 = vmul.f32 %v484, 0.5
        %v530 = vmul.f32 %v487, 0.5
        %v531 = vmul.f32 %v489, 0.5
        %v532 = vmul.f32 %v492, 0.5
        %v533 = vmul.f32 %v494, 0.5
        %v534 = vmul.f32 %v497, 0.5
        %v535 = vmul.f32 %v499, 0.5
        %v536 = vmul.f32 %v502, 0.5
        %v537 = vmul.f32 %v504, 0.5
        %v538 = vmul.f32 %v427, %v427
        %v539 = vmul.f32 %v429, %v429
        %v540 = vmul.f32 %v432, %v432
        %v541 = vmul.f32 %v434, %v434
        %v542 = vmul.f32 %v437, %v437
        %v543 = vmul.f32 %v439, %v439
        %v544 = vmul.f32 %v442, %v442
        %v545 = vmul.f32 %v444, %v444
        %v546 = vmul.f32 %v447, %v447
        %v547 = vmul.f32 %v449, %v449
        %v548 = vmul.f32 %v452, %v452
        %v549 = vmul.f32 %v454, %v454
        %v550 = vmul.f32 %v457, %v457
        %v551 = vmul.f32 %v459, %v459
        %v552 = vmul.f32 %v462, %v462
        %v553 = vmul.f32 %v464, %v464
        %v554 = vmul.f32 %v467, %v467
        %v555 = vmul.f32 %v469, %v469
        %v556 = vmul.f32 %v472, %v472
        %v557 = vmul.f32 %v474, %v474
        %v558 = vmul.f32 %v477, %v477
        %v559 = vmul.f32 %v479, %v479
        %v560 = vmul.f32 %v482, %v482
        %v561 = vmul.f32 %v484, %v484
        %v562 = vmul.f32 %v487, %v487
        %v563 = vmul.f32 %v489, %v489
        %v564 = vmul.f32 %v492, %v492
        %v565 = vmul.f32 %v494, %v494
        %v566 = vmul.f32 %v497, %v497
        %v567 = vmul.f32 %v499, %v499
        %v568 = vmul.f32 %v502, %v502
        %v569 = vmul.f32 %v504, %v504
        %v570 = vmul.f32 %v538, %v427
        %v571 = vmul.f32 %v539, %v429
        %v572 = vmul.f32 %v540, %v432
        %v573 = vmul.f32 %v541, %v434
        %v574 = vmul.f32 %v542, %v437
        %v575 = vmul.f32 %v543, %v439
        %v576 = vmul.f32 %v544, %v442
        %v577 = vmul.f32 %v545, %v444
        %v578 = vmul.f32 %v546, %v447
        %v579 = vmul.f32 %v547, %v449
        %v580 = vmul.f32 %v548, %v452
        %v581 = vmul.f32 %v549, %v454
        %v582 = vmul.f32 %v550, %v457
        %v583 = vmul.f32 %v551, %v459
        %v584 = vmul.f32 %v552, %v462
        %v585 = vmul.f32 %v553, %v464
        %v586 = vmul.f32 %v554, %v467
        %v587 = vmul.f32 %v555, %v469
        %v588 = vmul.f32 %v556, %v472
        %v589 = vmul.f32 %v557, %v474
        %v590 = vmul.f32 %v558, %v477
        %v591 = vmul.f32 %v559, %v479
        %v592 = vmul.f32 %v560, %v482
        %v593 = vmul.f32 %v561, %v484
        %v594 = vmul.f32 %v562, %v487
        %v595 = vmul.f32 %v563, %v489
        %v596 = vmul.f32 %v564, %v492
        %v597 = vmul.f32 %v565, %v494
        %v598 = vmul.f32 %v566, %v497
        %v599 = vmul.f32 %v567, %v499
        %v600 = vmul.f32 %v568, %v502
        %v601 = vmul.f32 %v569, %v504
        %v602 = vmul.f32 %v570, 0.044715
        %v603 = vmul.f32 %v571, 0.044715
        %v604 = vmul.f32 %v572, 0.044715
        %v605 = vmul.f32 %v573, 0.044715
        %v606 = vmul.f32 %v574, 0.044715
        %v607 = vmul.f32 %v575, 0.044715
        %v608 = vmul.f32 %v576, 0.044715
        %v609 = vmul.f32 %v577, 0.044715
        %v610 = vmul.f32 %v578, 0.044715
        %v611 = vmul.f32 %v579, 0.044715
        %v612 = vmul.f32 %v580, 0.044715
        %v613 = vmul.f32 %v581, 0.044715
        %v614 = vmul.f32 %v582, 0.044715
        %v615 = vmul.f32 %v583, 0.044715
        %v616 = vmul.f32 %v584, 0.044715
        %v617 = vmul.f32 %v585, 0.044715
        %v618 = vmul.f32 %v586, 0.044715
        %v619 = vmul.f32 %v587, 0.044715
        %v620 = vmul.f32 %v588, 0.044715
        %v621 = vmul.f32 %v589, 0.044715
        %v622 = vmul.f32 %v590, 0.044715
        %v623 = vmul.f32 %v591, 0.044715
        %v624 = vmul.f32 %v592, 0.044715
        %v625 = vmul.f32 %v593, 0.044715
        %v626 = vmul.f32 %v594, 0.044715
        %v627 = vmul.f32 %v595, 0.044715
        %v628 = vmul.f32 %v596, 0.044715
        %v629 = vmul.f32 %v597, 0.044715
        %v630 = vmul.f32 %v598, 0.044715
        %v631 = vmul.f32 %v599, 0.044715
        %v632 = vmul.f32 %v600, 0.044715
        %v633 = vmul.f32 %v601, 0.044715
        %v634 = vadd.f32 %v427, %v602
        %v635 = vadd.f32 %v429, %v603
        %v636 = vadd.f32 %v432, %v604
        %v637 = vadd.f32 %v434, %v605
        %v638 = vadd.f32 %v437, %v606
        %v639 = vadd.f32 %v439, %v607
        %v640 = vadd.f32 %v442, %v608
        %v641 = vadd.f32 %v444, %v609
        %v642 = vadd.f32 %v447, %v610
        %v643 = vadd.f32 %v449, %v611
        %v644 = vadd.f32 %v452, %v612
        %v645 = vadd.f32 %v454, %v613
        %v646 = vadd.f32 %v457, %v614
        %v647 = vadd.f32 %v459, %v615
        %v648 = vadd.f32 %v462, %v616
        %v649 = vadd.f32 %v464, %v617
        %v650 = vadd.f32 %v467, %v618
        %v651 = vadd.f32 %v469, %v619
        %v652 = vadd.f32 %v472, %v620
        %v653 = vadd.f32 %v474, %v621
        %v654 = vadd.f32 %v477, %v622
        %v655 = vadd.f32 %v479, %v623
        %v656 = vadd.f32 %v482, %v624
        %v657 = vadd.f32 %v484, %v625
        %v658 = vadd.f32 %v487, %v626
        %v659 = vadd.f32 %v489, %v627
        %v660 = vadd.f32 %v492, %v628
        %v661 = vadd.f32 %v494, %v629
        %v662 = vadd.f32 %v497, %v630
        %v663 = vadd.f32 %v499, %v631
        %v664 = vadd.f32 %v502, %v632
        %v665 = vadd.f32 %v504, %v633
        %v666 = vmul.f32 %v634, 0.7978846
        %v667 = vmul.f32 %v635, 0.7978846
        %v668 = vmul.f32 %v636, 0.7978846
        %v669 = vmul.f32 %v637, 0.7978846
        %v670 = vmul.f32 %v638, 0.7978846
        %v671 = vmul.f32 %v639, 0.7978846
        %v672 = vmul.f32 %v640, 0.7978846
        %v673 = vmul.f32 %v641, 0.7978846
        %v674 = vmul.f32 %v642, 0.7978846
        %v675 = vmul.f32 %v643, 0.7978846
        %v676 = vmul.f32 %v644, 0.7978846
        %v677 = vmul.f32 %v645, 0.7978846
        %v678 = vmul.f32 %v646, 0.7978846
        %v679 = vmul.f32 %v647, 0.7978846
        %v680 = vmul.f32 %v648, 0.7978846
        %v681 = vmul.f32 %v649, 0.7978846
        %v682 = vmul.f32 %v650, 0.7978846
        %v683 = vmul.f32 %v651, 0.7978846
        %v684 = vmul.f32 %v652, 0.7978846
        %v685 = vmul.f32 %v653, 0.7978846
        %v686 = vmul.f32 %v654, 0.7978846
        %v687 = vmul.f32 %v655, 0.7978846
        %v688 = vmul.f32 %v656, 0.7978846
        %v689 = vmul.f32 %v657, 0.7978846
        %v690 = vmul.f32 %v658, 0.7978846
        %v691 = vmul.f32 %v659, 0.7978846
        %v692 = vmul.f32 %v660, 0.7978846
        %v693 = vmul.f32 %v661, 0.7978846
        %v694 = vmul.f32 %v662, 0.7978846
        %v695 = vmul.f32 %v663, 0.7978846
        %v696 = vmul.f32 %v664, 0.7978846
        %v697 = vmul.f32 %v665, 0.7978846
        %v698 = vtanh.pop %v666
        %v699 = vtanh.pop %v667
        %v700 = vtanh.pop %v668
        %v701 = vtanh.pop %v669
        %v702 = vtanh.pop %v670
        %v703 = vtanh.pop %v671
        %v704 = vtanh.pop %v672
        %v705 = vtanh.pop %v673
        %v706 = vtanh.pop %v674
        %v707 = vtanh.pop %v675
        %v708 = vtanh.pop %v676
        %v709 = vtanh.pop %v677
        %v710 = vtanh.pop %v678
        %v711 = vtanh.pop %v679
        %v712 = vtanh.pop %v680
        %v713 = vtanh.pop %v681
        %v714 = vtanh.pop %v682
        %v715 = vtanh.pop %v683
        %v716 = vtanh.pop %v684
        %v717 = vtanh.pop %v685
        %v718 = vtanh.pop %v686
        %v719 = vtanh.pop %v687
        %v720 = vtanh.pop %v688
        %v721 = vtanh.pop %v689
        %v722 = vtanh.pop %v690
        %v723 = vtanh.pop %v691
        %v724 = vtanh.pop %v692
        %v725 = vtanh.pop %v693
        %v726 = vtanh.pop %v694
        %v727 = vtanh.pop %v695
        %v728 = vtanh.pop %v696
        %v729 = vtanh.pop %v697
        %v730 = vadd.f32 %v698, 1.0
        %v731 = vadd.f32 %v699, 1.0
        %v732 = vadd.f32 %v700, 1.0
        %v733 = vadd.f32 %v701, 1.0
        %v734 = vadd.f32 %v702, 1.0
        %v735 = vadd.f32 %v703, 1.0
        %v736 = vadd.f32 %v704, 1.0
        %v737 = vadd.f32 %v705, 1.0
        %v738 = vadd.f32 %v706, 1.0
        %v739 = vadd.f32 %v707, 1.0
        %v740 = vadd.f32 %v708, 1.0
        %v741 = vadd.f32 %v709, 1.0
        %v742 = vadd.f32 %v710, 1.0
        %v743 = vadd.f32 %v711, 1.0
        %v744 = vadd.f32 %v712, 1.0
        %v745 = vadd.f32 %v713, 1.0
        %v746 = vadd.f32 %v714, 1.0
        %v747 = vadd.f32 %v715, 1.0
        %v748 = vadd.f32 %v716, 1.0
        %v749 = vadd.f32 %v717, 1.0
        %v750 = vadd.f32 %v718, 1.0
        %v751 = vadd.f32 %v719, 1.0
        %v752 = vadd.f32 %v720, 1.0
        %v753 = vadd.f32 %v721, 1.0
        %v754 = vadd.f32 %v722, 1.0
        %v755 = vadd.f32 %v723, 1.0
        %v756 = vadd.f32 %v724, 1.0
        %v757 = vadd.f32 %v725, 1.0
        %v758 = vadd.f32 %v726, 1.0
        %v759 = vadd.f32 %v727, 1.0
        %v760 = vadd.f32 %v728, 1.0
        %v761 = vadd.f32 %v729, 1.0
        %v762 = vmul.f32 %v506, %v730
        %v763 = vmul.f32 %v507, %v731
        %v764 = vmul.f32 %v508, %v732
        %v765 = vmul.f32 %v509, %v733
        %v766 = vmul.f32 %v510, %v734
        %v767 = vmul.f32 %v511, %v735
        %v768 = vmul.f32 %v512, %v736
        %v769 = vmul.f32 %v513, %v737
        %v770 = vmul.f32 %v514, %v738
        %v771 = vmul.f32 %v515, %v739
        %v772 = vmul.f32 %v516, %v740
        %v773 = vmul.f32 %v517, %v741
        %v774 = vmul.f32 %v518, %v742
        %v775 = vmul.f32 %v519, %v743
        %v776 = vmul.f32 %v520, %v744
        %v777 = vmul.f32 %v521, %v745
        %v778 = vmul.f32 %v522, %v746
        %v779 = vmul.f32 %v523, %v747
        %v780 = vmul.f32 %v524, %v748
        %v781 = vmul.f32 %v525, %v749
        %v782 = vmul.f32 %v526, %v750
        %v783 = vmul.f32 %v527, %v751
        %v784 = vmul.f32 %v528, %v752
        %v785 = vmul.f32 %v529, %v753
        %v786 = vmul.f32 %v530, %v754
        %v787 = vmul.f32 %v531, %v755
        %v788 = vmul.f32 %v532, %v756
        %v789 = vmul.f32 %v533, %v757
        %v790 = vmul.f32 %v534, %v758
        %v791 = vmul.f32 %v535, %v759
        %v792 = vmul.f32 %v536, %v760
        %v793 = vmul.f32 %v537, %v761
        %794 = vst [vmem:[#allocation2] sm:$0xff] 0.0
        %795 = vst [vmem:[#allocation2 + $0x8] sm:$0xff] 0.0
        %s796 = scalar_lea.vmem [#allocation2], 272
        %797 = vst [vmem:[%s796] sm:$0xff] 0.0
        %798 = vst [vmem:[%s796 + $0x8] sm:$0xff] 0.0
        %s799 = scalar_lea.vmem [#allocation2], 16
        %800 = vst [vmem:[%s799] sm:$0xff] %v762
        %801 = vst [vmem:[%s799 + $0x8] sm:$0xff] %v763
        %802 = vst [vmem:[%s799 + $0x10] sm:$0xff] %v764
        %803 = vst [vmem:[%s799 + $0x18] sm:$0xff] %v765
        %804 = vst [vmem:[%s799 + $0x20] sm:$0xff] %v766
        %805 = vst [vmem:[%s799 + $0x28] sm:$0xff] %v767
        %806 = vst [vmem:[%s799 + $0x30] sm:$0xff] %v768
        %807 = vst [vmem:[%s799 + $0x38] sm:$0xff] %v769
        %808 = vst [vmem:[%s799 + $0x40] sm:$0xff] %v770
        %809 = vst [vmem:[%s799 + $0x48] sm:$0xff] %v771
        %810 = vst [vmem:[%s799 + $0x50] sm:$0xff] %v772
        %811 = vst [vmem:[%s799 + $0x58] sm:$0xff] %v773
        %812 = vst [vmem:[%s799 + $0x60] sm:$0xff] %v774
        %813 = vst [vmem:[%s799 + $0x68] sm:$0xff] %v775
        %814 = vst [vmem:[%s799 + $0x70] sm:$0xff] %v776
        %815 = vst [vmem:[%s799 + $0x78] sm:$0xff] %v777
        %816 = vst [vmem:[%s799 + $0x80] sm:$0xff] %v778
        %817 = vst [vmem:[%s799 + $0x88] sm:$0xff] %v779
        %818 = vst [vmem:[%s799 + $0x90] sm:$0xff] %v780
        %819 = vst [vmem:[%s799 + $0x98] sm:$0xff] %v781
        %820 = vst [vmem:[%s799 + $0xa0] sm:$0xff] %v782
        %821 = vst [vmem:[%s799 + $0xa8] sm:$0xff] %v783
        %822 = vst [vmem:[%s799 + $0xb0] sm:$0xff] %v784
        %823 = vst [vmem:[%s799 + $0xb8] sm:$0xff] %v785
        %824 = vst [vmem:[%s799 + $0xc0] sm:$0xff] %v786
        %825 = vst [vmem:[%s799 + $0xc8] sm:$0xff] %v787
        %826 = vst [vmem:[%s799 + $0xd0] sm:$0xff] %v788
        %827 = vst [vmem:[%s799 + $0xd8] sm:$0xff] %v789
        %828 = vst [vmem:[%s799 + $0xe0] sm:$0xff] %v790
        %829 = vst [vmem:[%s799 + $0xe8] sm:$0xff] %v791
        %830 = vst [vmem:[%s799 + $0xf0] sm:$0xff] %v792
        %831 = vst [vmem:[%s799 + $0xf8] sm:$0xff] %v793
        %v832 = vld [vmem:[%s3] sm:$0xff]
        %v833 = vld [vmem:[%s3 + $0x8] sm:$0x1]
        %v834 = vlaneseq
        %v835 = vshrl.u32 %v834, 7
        %v836 = vadd.s32 %v835, 8
        %v837 = vld [vmem:[#allocation2] sm:$0xff]
        %v838 = vld [vmem:[#allocation2 + $0x8] sm:$0xff]
        %v839 = vld [vmem:[#allocation2 + $0x10] sm:$0xff]
        %v840 = vld [vmem:[#allocation2 + $0x18] sm:$0xff]
        %v841 = vld [vmem:[#allocation2 + $0x20] sm:$0xff]
        %v842 = vld [vmem:[#allocation2 + $0x28] sm:$0xff]
        %v843 = vld [vmem:[#allocation2 + $0x30] sm:$0xff]
        %v844 = vld [vmem:[#allocation2 + $0x38] sm:$0xff]
        %v845 = vld [vmem:[#allocation2 + $0x40] sm:$0xff]
        %v846 = vld [vmem:[#allocation2 + $0x48] sm:$0xff]
        %v847 = vld [vmem:[#allocation2 + $0x50] sm:$0xff]
        %v848 = vld [vmem:[#allocation2 + $0x58] sm:$0xff]
        %v849 = vld [vmem:[#allocation2 + $0x60] sm:$0xff]
        %v850 = vld [vmem:[#allocation2 + $0x68] sm:$0xff]
        %v851 = vld [vmem:[#allocation2 + $0x70] sm:$0xff]
        %v852 = vld [vmem:[#allocation2 + $0x78] sm:$0xff]
        %v853 = vld [vmem:[#allocation2 + $0x80] sm:$0xff]
        %v854 = vld [vmem:[#allocation2 + $0x88] sm:$0xff]
        %v855 = vld [vmem:[#allocation2 + $0x90] sm:$0xff]
        %v856 = vld [vmem:[#allocation2 + $0x98] sm:$0xff]
        %v857 = vld [vmem:[#allocation2 + $0xa0] sm:$0xff]
        %v858 = vld [vmem:[#allocation2 + $0xa8] sm:$0xff]
        %v859 = vld [vmem:[#allocation2 + $0xb0] sm:$0xff]
        %v860 = vld [vmem:[#allocation2 + $0xb8] sm:$0xff]
        %v861 = vld [vmem:[#allocation2 + $0xc0] sm:$0xff]
        %v862 = vld [vmem:[#allocation2 + $0xc8] sm:$0xff]
        %v863 = vld [vmem:[#allocation2 + $0xd0] sm:$0xff]
        %v864 = vld [vmem:[#allocation2 + $0xd8] sm:$0xff]
        %v865 = vld [vmem:[#allocation2 + $0xe0] sm:$0xff]
        %v866 = vld [vmem:[#allocation2 + $0xe8] sm:$0xff]
        %v867 = vld [vmem:[#allocation2 + $0xf0] sm:$0xff]
        %v868 = vld [vmem:[#allocation2 + $0xf8] sm:$0xff]
        %v869 = vperm.slane %v832, 1
        %v870 = vmul.f32 %v837, %v869
        %v871 = vmul.f32 %v838, %v869
        %v872 = vmul.f32 %v839, %v869
        %v873 = vmul.f32 %v840, %v869
        %v874 = vmul.f32 %v841, %v869
        %v875 = vmul.f32 %v842, %v869
        %v876 = vmul.f32 %v843, %v869
        %v877 = vmul.f32 %v844, %v869
        %v878 = vmul.f32 %v845, %v869
        %v879 = vmul.f32 %v846, %v869
        %v880 = vmul.f32 %v847, %v869
        %v881 = vmul.f32 %v848, %v869
        %v882 = vmul.f32 %v849, %v869
        %v883 = vmul.f32 %v850, %v869
        %v884 = vmul.f32 %v851, %v869
        %v885 = vmul.f32 %v852, %v869
        %v886 = vmul.f32 %v853, %v869
        %v887 = vmul.f32 %v854, %v869
        %v888 = vmul.f32 %v855, %v869
        %v889 = vmul.f32 %v856, %v869
        %v890 = vmul.f32 %v857, %v869
        %v891 = vmul.f32 %v858, %v869
        %v892 = vmul.f32 %v859, %v869
        %v893 = vmul.f32 %v860, %v869
        %v894 = vmul.f32 %v861, %v869
        %v895 = vmul.f32 %v862, %v869
        %v896 = vmul.f32 %v863, %v869
        %v897 = vmul.f32 %v864, %v869
        %v898 = vmul.f32 %v865, %v869
        %v899 = vmul.f32 %v866, %v869
        %v900 = vmul.f32 %v867, %v869
        %v901 = vmul.f32 %v868, %v869
        %v902 = vld [vmem:[%s799] sm:$0xff]
        %v903 = vld [vmem:[%s799 + $0x8] sm:$0xff]
        %v904 = vld [vmem:[%s799 + $0x10] sm:$0xff]
        %v905 = vld [vmem:[%s799 + $0x18] sm:$0xff]
        %v906 = vld [vmem:[%s799 + $0x20] sm:$0xff]
        %v907 = vld [vmem:[%s799 + $0x28] sm:$0xff]
        %v908 = vld [vmem:[%s799 + $0x30] sm:$0xff]
        %v909 = vld [vmem:[%s799 + $0x38] sm:$0xff]
        %v910 = vld [vmem:[%s799 + $0x40] sm:$0xff]
        %v911 = vld [vmem:[%s799 + $0x48] sm:$0xff]
        %v912 = vld [vmem:[%s799 + $0x50] sm:$0xff]
        %v913 = vld [vmem:[%s799 + $0x58] sm:$0xff]
        %v914 = vld [vmem:[%s799 + $0x60] sm:$0xff]
        %v915 = vld [vmem:[%s799 + $0x68] sm:$0xff]
        %v916 = vld [vmem:[%s799 + $0x70] sm:$0xff]
        %v917 = vld [vmem:[%s799 + $0x78] sm:$0xff]
        %v918 = vld [vmem:[%s799 + $0x80] sm:$0xff]
        %v919 = vld [vmem:[%s799 + $0x88] sm:$0xff]
        %v920 = vld [vmem:[%s799 + $0x90] sm:$0xff]
        %v921 = vld [vmem:[%s799 + $0x98] sm:$0xff]
        %v922 = vld [vmem:[%s799 + $0xa0] sm:$0xff]
        %v923 = vld [vmem:[%s799 + $0xa8] sm:$0xff]
        %v924 = vld [vmem:[%s799 + $0xb0] sm:$0xff]
        %v925 = vld [vmem:[%s799 + $0xb8] sm:$0xff]
        %v926 = vld [vmem:[%s799 + $0xc0] sm:$0xff]
        %v927 = vld [vmem:[%s799 + $0xc8] sm:$0xff]
        %v928 = vld [vmem:[%s799 + $0xd0] sm:$0xff]
        %v929 = vld [vmem:[%s799 + $0xd8] sm:$0xff]
        %v930 = vld [vmem:[%s799 + $0xe0] sm:$0xff]
        %v931 = vld [vmem:[%s799 + $0xe8] sm:$0xff]
        %v932 = vld [vmem:[%s799 + $0xf0] sm:$0xff]
        %v933 = vld [vmem:[%s799 + $0xf8] sm:$0xff]
        %v934 = vperm.slane %v832, 4
        %v935 = vmul.f32 %v902, %v934
        %v936 = vmul.f32 %v903, %v934
        %v937 = vmul.f32 %v904, %v934
        %v938 = vmul.f32 %v905, %v934
        %v939 = vmul.f32 %v906, %v934
        %v940 = vmul.f32 %v907, %v934
        %v941 = vmul.f32 %v908, %v934
        %v942 = vmul.f32 %v909, %v934
        %v943 = vmul.f32 %v910, %v934
        %v944 = vmul.f32 %v911, %v934
        %v945 = vmul.f32 %v912, %v934
        %v946 = vmul.f32 %v913, %v934
        %v947 = vmul.f32 %v914, %v934
        %v948 = vmul.f32 %v915, %v934
        %v949 = vmul.f32 %v916, %v934
        %v950 = vmul.f32 %v917, %v934
        %v951 = vmul.f32 %v918, %v934
        %v952 = vmul.f32 %v919, %v934
        %v953 = vmul.f32 %v920, %v934
        %v954 = vmul.f32 %v921, %v934
        %v955 = vmul.f32 %v922, %v934
        %v956 = vmul.f32 %v923, %v934
        %v957 = vmul.f32 %v924, %v934
        %v958 = vmul.f32 %v925, %v934
        %v959 = vmul.f32 %v926, %v934
        %v960 = vmul.f32 %v927, %v934
        %v961 = vmul.f32 %v928, %v934
        %v962 = vmul.f32 %v929, %v934
        %v963 = vmul.f32 %v930, %v934
        %v964 = vmul.f32 %v931, %v934
        %v965 = vmul.f32 %v932, %v934
        %v966 = vmul.f32 %v933, %v934
        %v967 = vadd.f32 %v870, %v935
        %v968 = vadd.f32 %v871, %v936
        %v969 = vadd.f32 %v872, %v937
        %v970 = vadd.f32 %v873, %v938
        %v971 = vadd.f32 %v874, %v939
        %v972 = vadd.f32 %v875, %v940
        %v973 = vadd.f32 %v876, %v941
        %v974 = vadd.f32 %v877, %v942
        %v975 = vadd.f32 %v878, %v943
        %v976 = vadd.f32 %v879, %v944
        %v977 = vadd.f32 %v880, %v945
        %v978 = vadd.f32 %v881, %v946
        %v979 = vadd.f32 %v882, %v947
        %v980 = vadd.f32 %v883, %v948
        %v981 = vadd.f32 %v884, %v949
        %v982 = vadd.f32 %v885, %v950
        %v983 = vadd.f32 %v886, %v951
        %v984 = vadd.f32 %v887, %v952
        %v985 = vadd.f32 %v888, %v953
        %v986 = vadd.f32 %v889, %v954
        %v987 = vadd.f32 %v890, %v955
        %v988 = vadd.f32 %v891, %v956
        %v989 = vadd.f32 %v892, %v957
        %v990 = vadd.f32 %v893, %v958
        %v991 = vadd.f32 %v894, %v959
        %v992 = vadd.f32 %v895, %v960
        %v993 = vadd.f32 %v896, %v961
        %v994 = vadd.f32 %v897, %v962
        %v995 = vadd.f32 %v898, %v963
        %v996 = vadd.f32 %v899, %v964
        %v997 = vadd.f32 %v900, %v965
        %v998 = vadd.f32 %v901, %v966
        %s999 = scalar_lea.vmem [#allocation2], 32
        %v1000 = vld [vmem:[%s999] sm:$0xff]
        %v1001 = vld [vmem:[%s999 + $0x8] sm:$0xff]
        %v1002 = vld [vmem:[%s999 + $0x10] sm:$0xff]
        %v1003 = vld [vmem:[%s999 + $0x18] sm:$0xff]
        %v1004 = vld [vmem:[%s999 + $0x20] sm:$0xff]
        %v1005 = vld [vmem:[%s999 + $0x28] sm:$0xff]
        %v1006 = vld [vmem:[%s999 + $0x30] sm:$0xff]
        %v1007 = vld [vmem:[%s999 + $0x38] sm:$0xff]
        %v1008 = vld [vmem:[%s999 + $0x40] sm:$0xff]
        %v1009 = vld [vmem:[%s999 + $0x48] sm:$0xff]
        %v1010 = vld [vmem:[%s999 + $0x50] sm:$0xff]
        %v1011 = vld [vmem:[%s999 + $0x58] sm:$0xff]
        %v1012 = vld [vmem:[%s999 + $0x60] sm:$0xff]
        %v1013 = vld [vmem:[%s999 + $0x68] sm:$0xff]
        %v1014 = vld [vmem:[%s999 + $0x70] sm:$0xff]
        %v1015 = vld [vmem:[%s999 + $0x78] sm:$0xff]
        %v1016 = vld [vmem:[%s999 + $0x80] sm:$0xff]
        %v1017 = vld [vmem:[%s999 + $0x88] sm:$0xff]
        %v1018 = vld [vmem:[%s999 + $0x90] sm:$0xff]
        %v1019 = vld [vmem:[%s999 + $0x98] sm:$0xff]
        %v1020 = vld [vmem:[%s999 + $0xa0] sm:$0xff]
        %v1021 = vld [vmem:[%s999 + $0xa8] sm:$0xff]
        %v1022 = vld [vmem:[%s999 + $0xb0] sm:$0xff]
        %v1023 = vld [vmem:[%s999 + $0xb8] sm:$0xff]
        %v1024 = vld [vmem:[%s999 + $0xc0] sm:$0xff]
        %v1025 = vld [vmem:[%s999 + $0xc8] sm:$0xff]
        %v1026 = vld [vmem:[%s999 + $0xd0] sm:$0xff]
        %v1027 = vld [vmem:[%s999 + $0xd8] sm:$0xff]
        %v1028 = vld [vmem:[%s999 + $0xe0] sm:$0xff]
        %v1029 = vld [vmem:[%s999 + $0xe8] sm:$0xff]
        %v1030 = vld [vmem:[%s999 + $0xf0] sm:$0xff]
        %v1031 = vld [vmem:[%s999 + $0xf8] sm:$0xff]
        %v1032 = vperm.slane %v832, 7
        %v1033 = vmul.f32 %v1000, %v1032
        %v1034 = vmul.f32 %v1001, %v1032
        %v1035 = vmul.f32 %v1002, %v1032
        %v1036 = vmul.f32 %v1003, %v1032
        %v1037 = vmul.f32 %v1004, %v1032
        %v1038 = vmul.f32 %v1005, %v1032
        %v1039 = vmul.f32 %v1006, %v1032
        %v1040 = vmul.f32 %v1007, %v1032
        %v1041 = vmul.f32 %v1008, %v1032
        %v1042 = vmul.f32 %v1009, %v1032
        %v1043 = vmul.f32 %v1010, %v1032
        %v1044 = vmul.f32 %v1011, %v1032
        %v1045 = vmul.f32 %v1012, %v1032
        %v1046 = vmul.f32 %v1013, %v1032
        %v1047 = vmul.f32 %v1014, %v1032
        %v1048 = vmul.f32 %v1015, %v1032
        %v1049 = vmul.f32 %v1016, %v1032
        %v1050 = vmul.f32 %v1017, %v1032
        %v1051 = vmul.f32 %v1018, %v1032
        %v1052 = vmul.f32 %v1019, %v1032
        %v1053 = vmul.f32 %v1020, %v1032
        %v1054 = vmul.f32 %v1021, %v1032
        %v1055 = vmul.f32 %v1022, %v1032
        %v1056 = vmul.f32 %v1023, %v1032
        %v1057 = vmul.f32 %v1024, %v1032
        %v1058 = vmul.f32 %v1025, %v1032
        %v1059 = vmul.f32 %v1026, %v1032
        %v1060 = vmul.f32 %v1027, %v1032
        %v1061 = vmul.f32 %v1028, %v1032
        %v1062 = vmul.f32 %v1029, %v1032
        %v1063 = vmul.f32 %v1030, %v1032
        %v1064 = vmul.f32 %v1031, %v1032
        %v1065 = vadd.f32 %v967, %v1033
        %v1066 = vadd.f32 %v968, %v1034
        %v1067 = vadd.f32 %v969, %v1035
        %v1068 = vadd.f32 %v970, %v1036
        %v1069 = vadd.f32 %v971, %v1037
        %v1070 = vadd.f32 %v972, %v1038
        %v1071 = vadd.f32 %v973, %v1039
        %v1072 = vadd.f32 %v974, %v1040
        %v1073 = vadd.f32 %v975, %v1041
        %v1074 = vadd.f32 %v976, %v1042
        %v1075 = vadd.f32 %v977, %v1043
        %v1076 = vadd.f32 %v978, %v1044
        %v1077 = vadd.f32 %v979, %v1045
        %v1078 = vadd.f32 %v980, %v1046
        %v1079 = vadd.f32 %v981, %v1047
        %v1080 = vadd.f32 %v982, %v1048
        %v1081 = vadd.f32 %v983, %v1049
        %v1082 = vadd.f32 %v984, %v1050
        %v1083 = vadd.f32 %v985, %v1051
        %v1084 = vadd.f32 %v986, %v1052
        %v1085 = vadd.f32 %v987, %v1053
        %v1086 = vadd.f32 %v988, %v1054
        %v1087 = vadd.f32 %v989, %v1055
        %v1088 = vadd.f32 %v990, %v1056
        %v1089 = vadd.f32 %v991, %v1057
        %v1090 = vadd.f32 %v992, %v1058
        %v1091 = vadd.f32 %v993, %v1059
        %v1092 = vadd.f32 %v994, %v1060
        %v1093 = vadd.f32 %v995, %v1061
        %v1094 = vadd.f32 %v996, %v1062
        %v1095 = vadd.f32 %v997, %v1063
        %v1096 = vadd.f32 %v998, %v1064
        %v1097 = vperm.slane %v832, 2
        %v1098 = vmul.f32 %v837, %v1097
        %v1099 = vmul.f32 %v838, %v1097
        %v1100 = vmul.f32 %v839, %v1097
        %v1101 = vmul.f32 %v840, %v1097
        %v1102 = vmul.f32 %v841, %v1097
        %v1103 = vmul.f32 %v842, %v1097
        %v1104 = vmul.f32 %v843, %v1097
        %v1105 = vmul.f32 %v844, %v1097
        %v1106 = vmul.f32 %v845, %v1097
        %v1107 = vmul.f32 %v846, %v1097
        %v1108 = vmul.f32 %v847, %v1097
        %v1109 = vmul.f32 %v848, %v1097
        %v1110 = vmul.f32 %v849, %v1097
        %v1111 = vmul.f32 %v850, %v1097
        %v1112 = vmul.f32 %v851, %v1097
        %v1113 = vmul.f32 %v852, %v1097
        %v1114 = vmul.f32 %v853, %v1097
        %v1115 = vmul.f32 %v854, %v1097
        %v1116 = vmul.f32 %v855, %v1097
        %v1117 = vmul.f32 %v856, %v1097
        %v1118 = vmul.f32 %v857, %v1097
        %v1119 = vmul.f32 %v858, %v1097
        %v1120 = vmul.f32 %v859, %v1097
        %v1121 = vmul.f32 %v860, %v1097
        %v1122 = vmul.f32 %v861, %v1097
        %v1123 = vmul.f32 %v862, %v1097
        %v1124 = vmul.f32 %v863, %v1097
        %v1125 = vmul.f32 %v864, %v1097
        %v1126 = vmul.f32 %v865, %v1097
        %v1127 = vmul.f32 %v866, %v1097
        %v1128 = vmul.f32 %v867, %v1097
        %v1129 = vmul.f32 %v868, %v1097
        %v1130 = vperm.slane %v832, 5
        %v1131 = vmul.f32 %v902, %v1130
        %v1132 = vmul.f32 %v903, %v1130
        %v1133 = vmul.f32 %v904, %v1130
        %v1134 = vmul.f32 %v905, %v1130
        %v1135 = vmul.f32 %v906, %v1130
        %v1136 = vmul.f32 %v907, %v1130
        %v1137 = vmul.f32 %v908, %v1130
        %v1138 = vmul.f32 %v909, %v1130
        %v1139 = vmul.f32 %v910, %v1130
        %v1140 = vmul.f32 %v911, %v1130
        %v1141 = vmul.f32 %v912, %v1130
        %v1142 = vmul.f32 %v913, %v1130
        %v1143 = vmul.f32 %v914, %v1130
        %v1144 = vmul.f32 %v915, %v1130
        %v1145 = vmul.f32 %v916, %v1130
        %v1146 = vmul.f32 %v917, %v1130
        %v1147 = vmul.f32 %v918, %v1130
        %v1148 = vmul.f32 %v919, %v1130
        %v1149 = vmul.f32 %v920, %v1130
        %v1150 = vmul.f32 %v921, %v1130
        %v1151 = vmul.f32 %v922, %v1130
        %v1152 = vmul.f32 %v923, %v1130
        %v1153 = vmul.f32 %v924, %v1130
        %v1154 = vmul.f32 %v925, %v1130
        %v1155 = vmul.f32 %v926, %v1130
        %v1156 = vmul.f32 %v927, %v1130
        %v1157 = vmul.f32 %v928, %v1130
        %v1158 = vmul.f32 %v929, %v1130
        %v1159 = vmul.f32 %v930, %v1130
        %v1160 = vmul.f32 %v931, %v1130
        %v1161 = vmul.f32 %v932, %v1130
        %v1162 = vmul.f32 %v933, %v1130
        %v1163 = vadd.f32 %v1098, %v1131
        %v1164 = vadd.f32 %v1099, %v1132
        %v1165 = vadd.f32 %v1100, %v1133
        %v1166 = vadd.f32 %v1101, %v1134
        %v1167 = vadd.f32 %v1102, %v1135
        %v1168 = vadd.f32 %v1103, %v1136
        %v1169 = vadd.f32 %v1104, %v1137
        %v1170 = vadd.f32 %v1105, %v1138
        %v1171 = vadd.f32 %v1106, %v1139
        %v1172 = vadd.f32 %v1107, %v1140
        %v1173 = vadd.f32 %v1108, %v1141
        %v1174 = vadd.f32 %v1109, %v1142
        %v1175 = vadd.f32 %v1110, %v1143
        %v1176 = vadd.f32 %v1111, %v1144
        %v1177 = vadd.f32 %v1112, %v1145
        %v1178 = vadd.f32 %v1113, %v1146
        %v1179 = vadd.f32 %v1114, %v1147
        %v1180 = vadd.f32 %v1115, %v1148
        %v1181 = vadd.f32 %v1116, %v1149
        %v1182 = vadd.f32 %v1117, %v1150
        %v1183 = vadd.f32 %v1118, %v1151
        %v1184 = vadd.f32 %v1119, %v1152
        %v1185 = vadd.f32 %v1120, %v1153
        %v1186 = vadd.f32 %v1121, %v1154
        %v1187 = vadd.f32 %v1122, %v1155
        %v1188 = vadd.f32 %v1123, %v1156
        %v1189 = vadd.f32 %v1124, %v1157
        %v1190 = vadd.f32 %v1125, %v1158
        %v1191 = vadd.f32 %v1126, %v1159
        %v1192 = vadd.f32 %v1127, %v1160
        %v1193 = vadd.f32 %v1128, %v1161
        %v1194 = vadd.f32 %v1129, %v1162
        %v1195 = vperm.slane %v833, 0
        %v1196 = vmul.f32 %v1000, %v1195
        %v1197 = vmul.f32 %v1001, %v1195
        %v1198 = vmul.f32 %v1002, %v1195
        %v1199 = vmul.f32 %v1003, %v1195
        %v1200 = vmul.f32 %v1004, %v1195
        %v1201 = vmul.f32 %v1005, %v1195
        %v1202 = vmul.f32 %v1006, %v1195
        %v1203 = vmul.f32 %v1007, %v1195
        %v1204 = vmul.f32 %v1008, %v1195
        %v1205 = vmul.f32 %v1009, %v1195
        %v1206 = vmul.f32 %v1010, %v1195
        %v1207 = vmul.f32 %v1011, %v1195
        %v1208 = vmul.f32 %v1012, %v1195
        %v1209 = vmul.f32 %v1013, %v1195
        %v1210 = vmul.f32 %v1014, %v1195
        %v1211 = vmul.f32 %v1015, %v1195
        %v1212 = vmul.f32 %v1016, %v1195
        %v1213 = vmul.f32 %v1017, %v1195
        %v1214 = vmul.f32 %v1018, %v1195
        %v1215 = vmul.f32 %v1019, %v1195
        %v1216 = vmul.f32 %v1020, %v1195
        %v1217 = vmul.f32 %v1021, %v1195
        %v1218 = vmul.f32 %v1022, %v1195
        %v1219 = vmul.f32 %v1023, %v1195
        %v1220 = vmul.f32 %v1024, %v1195
        %v1221 = vmul.f32 %v1025, %v1195
        %v1222 = vmul.f32 %v1026, %v1195
        %v1223 = vmul.f32 %v1027, %v1195
        %v1224 = vmul.f32 %v1028, %v1195
        %v1225 = vmul.f32 %v1029, %v1195
        %v1226 = vmul.f32 %v1030, %v1195
        %v1227 = vmul.f32 %v1031, %v1195
        %v1228 = vadd.f32 %v1163, %v1196
        %v1229 = vadd.f32 %v1164, %v1197
        %v1230 = vadd.f32 %v1165, %v1198
        %v1231 = vadd.f32 %v1166, %v1199
        %v1232 = vadd.f32 %v1167, %v1200
        %v1233 = vadd.f32 %v1168, %v1201
        %v1234 = vadd.f32 %v1169, %v1202
        %v1235 = vadd.f32 %v1170, %v1203
        %v1236 = vadd.f32 %v1171, %v1204
        %v1237 = vadd.f32 %v1172, %v1205
        %v1238 = vadd.f32 %v1173, %v1206
        %v1239 = vadd.f32 %v1174, %v1207
        %v1240 = vadd.f32 %v1175, %v1208
        %v1241 = vadd.f32 %v1176, %v1209
        %v1242 = vadd.f32 %v1177, %v1210
        %v1243 = vadd.f32 %v1178, %v1211
        %v1244 = vadd.f32 %v1179, %v1212
        %v1245 = vadd.f32 %v1180, %v1213
        %v1246 = vadd.f32 %v1181, %v1214
        %v1247 = vadd.f32 %v1182, %v1215
        %v1248 = vadd.f32 %v1183, %v1216
        %v1249 = vadd.f32 %v1184, %v1217
        %v1250 = vadd.f32 %v1185, %v1218
        %v1251 = vadd.f32 %v1186, %v1219
        %v1252 = vadd.f32 %v1187, %v1220
        %v1253 = vadd.f32 %v1188, %v1221
        %v1254 = vadd.f32 %v1189, %v1222
        %v1255 = vadd.f32 %v1190, %v1223
        %v1256 = vadd.f32 %v1191, %v1224
        %v1257 = vadd.f32 %v1192, %v1225
        %v1258 = vadd.f32 %v1193, %v1226
        %v1259 = vadd.f32 %v1194, %v1227
        %v1260 = vrot.slane %v1228, 1
        %v1261 = vrot.slane %v1230, 1
        %v1262 = vrot.slane %v1232, 1
        %v1263 = vrot.slane %v1234, 1
        %v1264 = vrot.slane %v1236, 1
        %v1265 = vrot.slane %v1238, 1
        %v1266 = vrot.slane %v1240, 1
        %v1267 = vrot.slane %v1242, 1
        %v1268 = vrot.slane %v1244, 1
        %v1269 = vrot.slane %v1246, 1
        %v1270 = vrot.slane %v1248, 1
        %v1271 = vrot.slane %v1250, 1
        %v1272 = vrot.slane %v1252, 1
        %v1273 = vrot.slane %v1254, 1
        %v1274 = vrot.slane %v1256, 1
        %v1275 = vrot.slane %v1258, 1
        %v1276 = vrot.slane %v1229, 1
        %v1277 = vrot.slane %v1231, 1
        %v1278 = vrot.slane %v1233, 1
        %v1279 = vrot.slane %v1235, 1
        %v1280 = vrot.slane %v1237, 1
        %v1281 = vrot.slane %v1239, 1
        %v1282 = vrot.slane %v1241, 1
        %v1283 = vrot.slane %v1243, 1
        %v1284 = vrot.slane %v1245, 1
        %v1285 = vrot.slane %v1247, 1
        %v1286 = vrot.slane %v1249, 1
        %v1287 = vrot.slane %v1251, 1
        %v1288 = vrot.slane %v1253, 1
        %v1289 = vrot.slane %v1255, 1
        %v1290 = vrot.slane %v1257, 1
        %v1291 = vrot.slane %v1259, 1
        %vm1292 = vcmp.lt.s32.totalorder %v835, 7
        %v1293 = vsel %vm1292, %v1260, %v1276
        %v1294 = vsel %vm1292, %v1261, %v1277
        %v1295 = vsel %vm1292, %v1262, %v1278
        %v1296 = vsel %vm1292, %v1263, %v1279
        %v1297 = vsel %vm1292, %v1264, %v1280
        %v1298 = vsel %vm1292, %v1265, %v1281
        %v1299 = vsel %vm1292, %v1266, %v1282
        %v1300 = vsel %vm1292, %v1267, %v1283
        %v1301 = vsel %vm1292, %v1268, %v1284
        %v1302 = vsel %vm1292, %v1269, %v1285
        %v1303 = vsel %vm1292, %v1270, %v1286
        %v1304 = vsel %vm1292, %v1271, %v1287
        %v1305 = vsel %vm1292, %v1272, %v1288
        %v1306 = vsel %vm1292, %v1273, %v1289
        %v1307 = vsel %vm1292, %v1274, %v1290
        %v1308 = vsel %vm1292, %v1275, %v1291
        %v1309 = vsel %vm1292, %v1276, %v1260
        %v1310 = vsel %vm1292, %v1277, %v1261
        %v1311 = vsel %vm1292, %v1278, %v1262
        %v1312 = vsel %vm1292, %v1279, %v1263
        %v1313 = vsel %vm1292, %v1280, %v1264
        %v1314 = vsel %vm1292, %v1281, %v1265
        %v1315 = vsel %vm1292, %v1282, %v1266
        %v1316 = vsel %vm1292, %v1283, %v1267
        %v1317 = vsel %vm1292, %v1284, %v1268
        %v1318 = vsel %vm1292, %v1285, %v1269
        %v1319 = vsel %vm1292, %v1286, %v1270
        %v1320 = vsel %vm1292, %v1287, %v1271
        %v1321 = vsel %vm1292, %v1288, %v1272
        %v1322 = vsel %vm1292, %v1289, %v1273
        %v1323 = vsel %vm1292, %v1290, %v1274
        %v1324 = vsel %vm1292, %v1291, %v1275
        %vm1325 = vcmp.lt.s32.totalorder %v835, 15
        %vm1326 = vcmp.lt.s32.totalorder %v836, 15
        %v1327 = vsel %vm1325, 1, 0
        %v1328 = vsel %vm1326, 1, 0
        %vm1329 = vcmp.eq.s32.totalorder %v1327, 1
        %vm1330 = vcmp.eq.s32.totalorder %v1328, 1
        %v1331 = vsel %vm1329, %v1293, 0.0
        %v1332 = vsel %vm1330, %v1309, 0.0
        %v1333 = vsel %vm1329, %v1294, 0.0
        %v1334 = vsel %vm1330, %v1310, 0.0
        %v1335 = vsel %vm1329, %v1295, 0.0
        %v1336 = vsel %vm1330, %v1311, 0.0
        %v1337 = vsel %vm1329, %v1296, 0.0
        %v1338 = vsel %vm1330, %v1312, 0.0
        %v1339 = vsel %vm1329, %v1297, 0.0
        %v1340 = vsel %vm1330, %v1313, 0.0
        %v1341 = vsel %vm1329, %v1298, 0.0
        %v1342 = vsel %vm1330, %v1314, 0.0
        %v1343 = vsel %vm1329, %v1299, 0.0
        %v1344 = vsel %vm1330, %v1315, 0.0
        %v1345 = vsel %vm1329, %v1300, 0.0
        %v1346 = vsel %vm1330, %v1316, 0.0
        %v1347 = vsel %vm1329, %v1301, 0.0
        %v1348 = vsel %vm1330, %v1317, 0.0
        %v1349 = vsel %vm1329, %v1302, 0.0
        %v1350 = vsel %vm1330, %v1318, 0.0
        %v1351 = vsel %vm1329, %v1303, 0.0
        %v1352 = vsel %vm1330, %v1319, 0.0
        %v1353 = vsel %vm1329, %v1304, 0.0
        %v1354 = vsel %vm1330, %v1320, 0.0
        %v1355 = vsel %vm1329, %v1305, 0.0
        %v1356 = vsel %vm1330, %v1321, 0.0
        %v1357 = vsel %vm1329, %v1306, 0.0
        %v1358 = vsel %vm1330, %v1322, 0.0
        %v1359 = vsel %vm1329, %v1307, 0.0
        %v1360 = vsel %vm1330, %v1323, 0.0
        %v1361 = vsel %vm1329, %v1308, 0.0
        %v1362 = vsel %vm1330, %v1324, 0.0
        %v1363 = vadd.f32 %v1065, %v1331
        %v1364 = vadd.f32 %v1066, %v1332
        %v1365 = vadd.f32 %v1067, %v1333
        %v1366 = vadd.f32 %v1068, %v1334
        %v1367 = vadd.f32 %v1069, %v1335
        %v1368 = vadd.f32 %v1070, %v1336
        %v1369 = vadd.f32 %v1071, %v1337
        %v1370 = vadd.f32 %v1072, %v1338
        %v1371 = vadd.f32 %v1073, %v1339
        %v1372 = vadd.f32 %v1074, %v1340
        %v1373 = vadd.f32 %v1075, %v1341
        %v1374 = vadd.f32 %v1076, %v1342
        %v1375 = vadd.f32 %v1077, %v1343
        %v1376 = vadd.f32 %v1078, %v1344
        %v1377 = vadd.f32 %v1079, %v1345
        %v1378 = vadd.f32 %v1080, %v1346
        %v1379 = vadd.f32 %v1081, %v1347
        %v1380 = vadd.f32 %v1082, %v1348
        %v1381 = vadd.f32 %v1083, %v1349
        %v1382 = vadd.f32 %v1084, %v1350
        %v1383 = vadd.f32 %v1085, %v1351
        %v1384 = vadd.f32 %v1086, %v1352
        %v1385 = vadd.f32 %v1087, %v1353
        %v1386 = vadd.f32 %v1088, %v1354
        %v1387 = vadd.f32 %v1089, %v1355
        %v1388 = vadd.f32 %v1090, %v1356
        %v1389 = vadd.f32 %v1091, %v1357
        %v1390 = vadd.f32 %v1092, %v1358
        %v1391 = vadd.f32 %v1093, %v1359
        %v1392 = vadd.f32 %v1094, %v1360
        %v1393 = vadd.f32 %v1095, %v1361
        %v1394 = vadd.f32 %v1096, %v1362
        %v1395 = vperm.slane %v832, 0
        %v1396 = vmul.f32 %v837, %v1395
        %v1397 = vmul.f32 %v838, %v1395
        %v1398 = vmul.f32 %v839, %v1395
        %v1399 = vmul.f32 %v840, %v1395
        %v1400 = vmul.f32 %v841, %v1395
        %v1401 = vmul.f32 %v842, %v1395
        %v1402 = vmul.f32 %v843, %v1395
        %v1403 = vmul.f32 %v844, %v1395
        %v1404 = vmul.f32 %v845, %v1395
        %v1405 = vmul.f32 %v846, %v1395
        %v1406 = vmul.f32 %v847, %v1395
        %v1407 = vmul.f32 %v848, %v1395
        %v1408 = vmul.f32 %v849, %v1395
        %v1409 = vmul.f32 %v850, %v1395
        %v1410 = vmul.f32 %v851, %v1395
        %v1411 = vmul.f32 %v852, %v1395
        %v1412 = vmul.f32 %v853, %v1395
        %v1413 = vmul.f32 %v854, %v1395
        %v1414 = vmul.f32 %v855, %v1395
        %v1415 = vmul.f32 %v856, %v1395
        %v1416 = vmul.f32 %v857, %v1395
        %v1417 = vmul.f32 %v858, %v1395
        %v1418 = vmul.f32 %v859, %v1395
        %v1419 = vmul.f32 %v860, %v1395
        %v1420 = vmul.f32 %v861, %v1395
        %v1421 = vmul.f32 %v862, %v1395
        %v1422 = vmul.f32 %v863, %v1395
        %v1423 = vmul.f32 %v864, %v1395
        %v1424 = vmul.f32 %v865, %v1395
        %v1425 = vmul.f32 %v866, %v1395
        %v1426 = vmul.f32 %v867, %v1395
        %v1427 = vmul.f32 %v868, %v1395
        %v1428 = vperm.slane %v832, 3
        %v1429 = vmul.f32 %v902, %v1428
        %v1430 = vmul.f32 %v903, %v1428
        %v1431 = vmul.f32 %v904, %v1428
        %v1432 = vmul.f32 %v905, %v1428
        %v1433 = vmul.f32 %v906, %v1428
        %v1434 = vmul.f32 %v907, %v1428
        %v1435 = vmul.f32 %v908, %v1428
        %v1436 = vmul.f32 %v909, %v1428
        %v1437 = vmul.f32 %v910, %v1428
        %v1438 = vmul.f32 %v911, %v1428
        %v1439 = vmul.f32 %v912, %v1428
        %v1440 = vmul.f32 %v913, %v1428
        %v1441 = vmul.f32 %v914, %v1428
        %v1442 = vmul.f32 %v915, %v1428
        %v1443 = vmul.f32 %v916, %v1428
        %v1444 = vmul.f32 %v917, %v1428
        %v1445 = vmul.f32 %v918, %v1428
        %v1446 = vmul.f32 %v919, %v1428
        %v1447 = vmul.f32 %v920, %v1428
        %v1448 = vmul.f32 %v921, %v1428
        %v1449 = vmul.f32 %v922, %v1428
        %v1450 = vmul.f32 %v923, %v1428
        %v1451 = vmul.f32 %v924, %v1428
        %v1452 = vmul.f32 %v925, %v1428
        %v1453 = vmul.f32 %v926, %v1428
        %v1454 = vmul.f32 %v927, %v1428
        %v1455 = vmul.f32 %v928, %v1428
        %v1456 = vmul.f32 %v929, %v1428
        %v1457 = vmul.f32 %v930, %v1428
        %v1458 = vmul.f32 %v931, %v1428
        %v1459 = vmul.f32 %v932, %v1428
        %v1460 = vmul.f32 %v933, %v1428
        %v1461 = vadd.f32 %v1396, %v1429
        %v1462 = vadd.f32 %v1397, %v1430
        %v1463 = vadd.f32 %v1398, %v1431
        %v1464 = vadd.f32 %v1399, %v1432
        %v1465 = vadd.f32 %v1400, %v1433
        %v1466 = vadd.f32 %v1401, %v1434
        %v1467 = vadd.f32 %v1402, %v1435
        %v1468 = vadd.f32 %v1403, %v1436
        %v1469 = vadd.f32 %v1404, %v1437
        %v1470 = vadd.f32 %v1405, %v1438
        %v1471 = vadd.f32 %v1406, %v1439
        %v1472 = vadd.f32 %v1407, %v1440
        %v1473 = vadd.f32 %v1408, %v1441
        %v1474 = vadd.f32 %v1409, %v1442
        %v1475 = vadd.f32 %v1410, %v1443
        %v1476 = vadd.f32 %v1411, %v1444
        %v1477 = vadd.f32 %v1412, %v1445
        %v1478 = vadd.f32 %v1413, %v1446
        %v1479 = vadd.f32 %v1414, %v1447
        %v1480 = vadd.f32 %v1415, %v1448
        %v1481 = vadd.f32 %v1416, %v1449
        %v1482 = vadd.f32 %v1417, %v1450
        %v1483 = vadd.f32 %v1418, %v1451
        %v1484 = vadd.f32 %v1419, %v1452
        %v1485 = vadd.f32 %v1420, %v1453
        %v1486 = vadd.f32 %v1421, %v1454
        %v1487 = vadd.f32 %v1422, %v1455
        %v1488 = vadd.f32 %v1423, %v1456
        %v1489 = vadd.f32 %v1424, %v1457
        %v1490 = vadd.f32 %v1425, %v1458
        %v1491 = vadd.f32 %v1426, %v1459
        %v1492 = vadd.f32 %v1427, %v1460
        %v1493 = vperm.slane %v832, 6
        %v1494 = vmul.f32 %v1000, %v1493
        %v1495 = vmul.f32 %v1001, %v1493
        %v1496 = vmul.f32 %v1002, %v1493
        %v1497 = vmul.f32 %v1003, %v1493
        %v1498 = vmul.f32 %v1004, %v1493
        %v1499 = vmul.f32 %v1005, %v1493
        %v1500 = vmul.f32 %v1006, %v1493
        %v1501 = vmul.f32 %v1007, %v1493
        %v1502 = vmul.f32 %v1008, %v1493
        %v1503 = vmul.f32 %v1009, %v1493
        %v1504 = vmul.f32 %v1010, %v1493
        %v1505 = vmul.f32 %v1011, %v1493
        %v1506 = vmul.f32 %v1012, %v1493
        %v1507 = vmul.f32 %v1013, %v1493
        %v1508 = vmul.f32 %v1014, %v1493
        %v1509 = vmul.f32 %v1015, %v1493
        %v1510 = vmul.f32 %v1016, %v1493
        %v1511 = vmul.f32 %v1017, %v1493
        %v1512 = vmul.f32 %v1018, %v1493
        %v1513 = vmul.f32 %v1019, %v1493
        %v1514 = vmul.f32 %v1020, %v1493
        %v1515 = vmul.f32 %v1021, %v1493
        %v1516 = vmul.f32 %v1022, %v1493
        %v1517 = vmul.f32 %v1023, %v1493
        %v1518 = vmul.f32 %v1024, %v1493
        %v1519 = vmul.f32 %v1025, %v1493
        %v1520 = vmul.f32 %v1026, %v1493
        %v1521 = vmul.f32 %v1027, %v1493
        %v1522 = vmul.f32 %v1028, %v1493
        %v1523 = vmul.f32 %v1029, %v1493
        %v1524 = vmul.f32 %v1030, %v1493
        %v1525 = vmul.f32 %v1031, %v1493
        %v1526 = vadd.f32 %v1461, %v1494
        %v1527 = vadd.f32 %v1462, %v1495
        %v1528 = vadd.f32 %v1463, %v1496
        %v1529 = vadd.f32 %v1464, %v1497
        %v1530 = vadd.f32 %v1465, %v1498
        %v1531 = vadd.f32 %v1466, %v1499
        %v1532 = vadd.f32 %v1467, %v1500
        %v1533 = vadd.f32 %v1468, %v1501
        %v1534 = vadd.f32 %v1469, %v1502
        %v1535 = vadd.f32 %v1470, %v1503
        %v1536 = vadd.f32 %v1471, %v1504
        %v1537 = vadd.f32 %v1472, %v1505
        %v1538 = vadd.f32 %v1473, %v1506
        %v1539 = vadd.f32 %v1474, %v1507
        %v1540 = vadd.f32 %v1475, %v1508
        %v1541 = vadd.f32 %v1476, %v1509
        %v1542 = vadd.f32 %v1477, %v1510
        %v1543 = vadd.f32 %v1478, %v1511
        %v1544 = vadd.f32 %v1479, %v1512
        %v1545 = vadd.f32 %v1480, %v1513
        %v1546 = vadd.f32 %v1481, %v1514
        %v1547 = vadd.f32 %v1482, %v1515
        %v1548 = vadd.f32 %v1483, %v1516
        %v1549 = vadd.f32 %v1484, %v1517
        %v1550 = vadd.f32 %v1485, %v1518
        %v1551 = vadd.f32 %v1486, %v1519
        %v1552 = vadd.f32 %v1487, %v1520
        %v1553 = vadd.f32 %v1488, %v1521
        %v1554 = vadd.f32 %v1489, %v1522
        %v1555 = vadd.f32 %v1490, %v1523
        %v1556 = vadd.f32 %v1491, %v1524
        %v1557 = vadd.f32 %v1492, %v1525
        %v1558 = vrot.slane %v1526, 7
        %v1559 = vrot.slane %v1528, 7
        %v1560 = vrot.slane %v1530, 7
        %v1561 = vrot.slane %v1532, 7
        %v1562 = vrot.slane %v1534, 7
        %v1563 = vrot.slane %v1536, 7
        %v1564 = vrot.slane %v1538, 7
        %v1565 = vrot.slane %v1540, 7
        %v1566 = vrot.slane %v1542, 7
        %v1567 = vrot.slane %v1544, 7
        %v1568 = vrot.slane %v1546, 7
        %v1569 = vrot.slane %v1548, 7
        %v1570 = vrot.slane %v1550, 7
        %v1571 = vrot.slane %v1552, 7
        %v1572 = vrot.slane %v1554, 7
        %v1573 = vrot.slane %v1556, 7
        %v1574 = vrot.slane %v1527, 7
        %v1575 = vrot.slane %v1529, 7
        %v1576 = vrot.slane %v1531, 7
        %v1577 = vrot.slane %v1533, 7
        %v1578 = vrot.slane %v1535, 7
        %v1579 = vrot.slane %v1537, 7
        %v1580 = vrot.slane %v1539, 7
        %v1581 = vrot.slane %v1541, 7
        %v1582 = vrot.slane %v1543, 7
        %v1583 = vrot.slane %v1545, 7
        %v1584 = vrot.slane %v1547, 7
        %v1585 = vrot.slane %v1549, 7
        %v1586 = vrot.slane %v1551, 7
        %v1587 = vrot.slane %v1553, 7
        %v1588 = vrot.slane %v1555, 7
        %v1589 = vrot.slane %v1557, 7
        %vm1590 = vcmp.lt.s32.totalorder %v835, 1
        %v1591 = vsel %vm1590, %v1558, %v1574
        %v1592 = vsel %vm1590, %v1559, %v1575
        %v1593 = vsel %vm1590, %v1560, %v1576
        %v1594 = vsel %vm1590, %v1561, %v1577
        %v1595 = vsel %vm1590, %v1562, %v1578
        %v1596 = vsel %vm1590, %v1563, %v1579
        %v1597 = vsel %vm1590, %v1564, %v1580
        %v1598 = vsel %vm1590, %v1565, %v1581
        %v1599 = vsel %vm1590, %v1566, %v1582
        %v1600 = vsel %vm1590, %v1567, %v1583
        %v1601 = vsel %vm1590, %v1568, %v1584
        %v1602 = vsel %vm1590, %v1569, %v1585
        %v1603 = vsel %vm1590, %v1570, %v1586
        %v1604 = vsel %vm1590, %v1571, %v1587
        %v1605 = vsel %vm1590, %v1572, %v1588
        %v1606 = vsel %vm1590, %v1573, %v1589
        %v1607 = vsel %vm1590, %v1574, %v1558
        %v1608 = vsel %vm1590, %v1575, %v1559
        %v1609 = vsel %vm1590, %v1576, %v1560
        %v1610 = vsel %vm1590, %v1577, %v1561
        %v1611 = vsel %vm1590, %v1578, %v1562
        %v1612 = vsel %vm1590, %v1579, %v1563
        %v1613 = vsel %vm1590, %v1580, %v1564
        %v1614 = vsel %vm1590, %v1581, %v1565
        %v1615 = vsel %vm1590, %v1582, %v1566
        %v1616 = vsel %vm1590, %v1583, %v1567
        %v1617 = vsel %vm1590, %v1584, %v1568
        %v1618 = vsel %vm1590, %v1585, %v1569
        %v1619 = vsel %vm1590, %v1586, %v1570
        %v1620 = vsel %vm1590, %v1587, %v1571
        %v1621 = vsel %vm1590, %v1588, %v1572
        %v1622 = vsel %vm1590, %v1589, %v1573
        %vm1623 = vcmp.gt.s32.totalorder %v835, 0
        %vm1624 = vcmp.gt.s32.totalorder %v836, 0
        %v1625 = vsel %vm1623, 1, 0
        %v1626 = vsel %vm1624, 1, 0
        %vm1627 = vcmp.eq.s32.totalorder %v1625, 1
        %vm1628 = vcmp.eq.s32.totalorder %v1626, 1
        %v1629 = vsel %vm1627, %v1607, 0.0
        %v1630 = vsel %vm1628, %v1591, 0.0
        %v1631 = vsel %vm1627, %v1608, 0.0
        %v1632 = vsel %vm1628, %v1592, 0.0
        %v1633 = vsel %vm1627, %v1609, 0.0
        %v1634 = vsel %vm1628, %v1593, 0.0
        %v1635 = vsel %vm1627, %v1610, 0.0
        %v1636 = vsel %vm1628, %v1594, 0.0
        %v1637 = vsel %vm1627, %v1611, 0.0
        %v1638 = vsel %vm1628, %v1595, 0.0
        %v1639 = vsel %vm1627, %v1612, 0.0
        %v1640 = vsel %vm1628, %v1596, 0.0
        %v1641 = vsel %vm1627, %v1613, 0.0
        %v1642 = vsel %vm1628, %v1597, 0.0
        %v1643 = vsel %vm1627, %v1614, 0.0
        %v1644 = vsel %vm1628, %v1598, 0.0
        %v1645 = vsel %vm1627, %v1615, 0.0
        %v1646 = vsel %vm1628, %v1599, 0.0
        %v1647 = vsel %vm1627, %v1616, 0.0
        %v1648 = vsel %vm1628, %v1600, 0.0
        %v1649 = vsel %vm1627, %v1617, 0.0
        %v1650 = vsel %vm1628, %v1601, 0.0
        %v1651 = vsel %vm1627, %v1618, 0.0
        %v1652 = vsel %vm1628, %v1602, 0.0
        %v1653 = vsel %vm1627, %v1619, 0.0
        %v1654 = vsel %vm1628, %v1603, 0.0
        %v1655 = vsel %vm1627, %v1620, 0.0
        %v1656 = vsel %vm1628, %v1604, 0.0
        %v1657 = vsel %vm1627, %v1621, 0.0
        %v1658 = vsel %vm1628, %v1605, 0.0
        %v1659 = vsel %vm1627, %v1622, 0.0
        %v1660 = vsel %vm1628, %v1606, 0.0
        %v1661 = vadd.f32 %v1363, %v1629
        %v1662 = vadd.f32 %v1364, %v1630
        %v1663 = vadd.f32 %v1365, %v1631
        %v1664 = vadd.f32 %v1366, %v1632
        %v1665 = vadd.f32 %v1367, %v1633
        %v1666 = vadd.f32 %v1368, %v1634
        %v1667 = vadd.f32 %v1369, %v1635
        %v1668 = vadd.f32 %v1370, %v1636
        %v1669 = vadd.f32 %v1371, %v1637
        %v1670 = vadd.f32 %v1372, %v1638
        %v1671 = vadd.f32 %v1373, %v1639
        %v1672 = vadd.f32 %v1374, %v1640
        %v1673 = vadd.f32 %v1375, %v1641
        %v1674 = vadd.f32 %v1376, %v1642
        %v1675 = vadd.f32 %v1377, %v1643
        %v1676 = vadd.f32 %v1378, %v1644
        %v1677 = vadd.f32 %v1379, %v1645
        %v1678 = vadd.f32 %v1380, %v1646
        %v1679 = vadd.f32 %v1381, %v1647
        %v1680 = vadd.f32 %v1382, %v1648
        %v1681 = vadd.f32 %v1383, %v1649
        %v1682 = vadd.f32 %v1384, %v1650
        %v1683 = vadd.f32 %v1385, %v1651
        %v1684 = vadd.f32 %v1386, %v1652
        %v1685 = vadd.f32 %v1387, %v1653
        %v1686 = vadd.f32 %v1388, %v1654
        %v1687 = vadd.f32 %v1389, %v1655
        %v1688 = vadd.f32 %v1390, %v1656
        %v1689 = vadd.f32 %v1391, %v1657
        %v1690 = vadd.f32 %v1392, %v1658
        %v1691 = vadd.f32 %v1393, %v1659
        %v1692 = vadd.f32 %v1394, %v1660
        %v1693 = vld [vmem:[%s4] sm:$0x1]
        %v1695 = vperm.slane %v1693, 0
        %v1697 = vadd.f32 %v1661, %v1695
        %v1698 = vadd.f32 %v1662, %v1695
        %v1699 = vadd.f32 %v1663, %v1695
        %v1700 = vadd.f32 %v1664, %v1695
        %v1701 = vadd.f32 %v1665, %v1695
        %v1702 = vadd.f32 %v1666, %v1695
        %v1703 = vadd.f32 %v1667, %v1695
        %v1704 = vadd.f32 %v1668, %v1695
        %v1705 = vadd.f32 %v1669, %v1695
        %v1706 = vadd.f32 %v1670, %v1695
        %v1707 = vadd.f32 %v1671, %v1695
        %v1708 = vadd.f32 %v1672, %v1695
        %v1709 = vadd.f32 %v1673, %v1695
        %v1710 = vadd.f32 %v1674, %v1695
        %v1711 = vadd.f32 %v1675, %v1695
        %v1712 = vadd.f32 %v1676, %v1695
        %v1713 = vadd.f32 %v1677, %v1695
        %v1714 = vadd.f32 %v1678, %v1695
        %v1715 = vadd.f32 %v1679, %v1695
        %v1716 = vadd.f32 %v1680, %v1695
        %v1717 = vadd.f32 %v1681, %v1695
        %v1718 = vadd.f32 %v1682, %v1695
        %v1719 = vadd.f32 %v1683, %v1695
        %v1720 = vadd.f32 %v1684, %v1695
        %v1721 = vadd.f32 %v1685, %v1695
        %v1722 = vadd.f32 %v1686, %v1695
        %v1723 = vadd.f32 %v1687, %v1695
        %v1724 = vadd.f32 %v1688, %v1695
        %v1725 = vadd.f32 %v1689, %v1695
        %v1726 = vadd.f32 %v1690, %v1695
        %v1727 = vadd.f32 %v1691, %v1695
        %v1728 = vadd.f32 %v1692, %v1695
        %v1729 = vmul.f32 %v1697, 0.5
        %v1730 = vmul.f32 %v1698, 0.5
        %v1731 = vmul.f32 %v1699, 0.5
        %v1732 = vmul.f32 %v1700, 0.5
        %v1733 = vmul.f32 %v1701, 0.5
        %v1734 = vmul.f32 %v1702, 0.5
        %v1735 = vmul.f32 %v1703, 0.5
        %v1736 = vmul.f32 %v1704, 0.5
        %v1737 = vmul.f32 %v1705, 0.5
        %v1738 = vmul.f32 %v1706, 0.5
        %v1739 = vmul.f32 %v1707, 0.5
        %v1740 = vmul.f32 %v1708, 0.5
        %v1741 = vmul.f32 %v1709, 0.5
        %v1742 = vmul.f32 %v1710, 0.5
        %v1743 = vmul.f32 %v1711, 0.5
        %v1744 = vmul.f32 %v1712, 0.5
        %v1745 = vmul.f32 %v1713, 0.5
        %v1746 = vmul.f32 %v1714, 0.5
        %v1747 = vmul.f32 %v1715, 0.5
        %v1748 = vmul.f32 %v1716, 0.5
        %v1749 = vmul.f32 %v1717, 0.5
        %v1750 = vmul.f32 %v1718, 0.5
        %v1751 = vmul.f32 %v1719, 0.5
        %v1752 = vmul.f32 %v1720, 0.5
        %v1753 = vmul.f32 %v1721, 0.5
        %v1754 = vmul.f32 %v1722, 0.5
        %v1755 = vmul.f32 %v1723, 0.5
        %v1756 = vmul.f32 %v1724, 0.5
        %v1757 = vmul.f32 %v1725, 0.5
        %v1758 = vmul.f32 %v1726, 0.5
        %v1759 = vmul.f32 %v1727, 0.5
        %v1760 = vmul.f32 %v1728, 0.5
        %v1761 = vmul.f32 %v1697, %v1697
        %v1762 = vmul.f32 %v1698, %v1698
        %v1763 = vmul.f32 %v1699, %v1699
        %v1764 = vmul.f32 %v1700, %v1700
        %v1765 = vmul.f32 %v1701, %v1701
        %v1766 = vmul.f32 %v1702, %v1702
        %v1767 = vmul.f32 %v1703, %v1703
        %v1768 = vmul.f32 %v1704, %v1704
        %v1769 = vmul.f32 %v1705, %v1705
        %v1770 = vmul.f32 %v1706, %v1706
        %v1771 = vmul.f32 %v1707, %v1707
        %v1772 = vmul.f32 %v1708, %v1708
        %v1773 = vmul.f32 %v1709, %v1709
        %v1774 = vmul.f32 %v1710, %v1710
        %v1775 = vmul.f32 %v1711, %v1711
        %v1776 = vmul.f32 %v1712, %v1712
        %v1777 = vmul.f32 %v1713, %v1713
        %v1778 = vmul.f32 %v1714, %v1714
        %v1779 = vmul.f32 %v1715, %v1715
        %v1780 = vmul.f32 %v1716, %v1716
        %v1781 = vmul.f32 %v1717, %v1717
        %v1782 = vmul.f32 %v1718, %v1718
        %v1783 = vmul.f32 %v1719, %v1719
        %v1784 = vmul.f32 %v1720, %v1720
        %v1785 = vmul.f32 %v1721, %v1721
        %v1786 = vmul.f32 %v1722, %v1722
        %v1787 = vmul.f32 %v1723, %v1723
        %v1788 = vmul.f32 %v1724, %v1724
        %v1789 = vmul.f32 %v1725, %v1725
        %v1790 = vmul.f32 %v1726, %v1726
        %v1791 = vmul.f32 %v1727, %v1727
        %v1792 = vmul.f32 %v1728, %v1728
        %v1793 = vmul.f32 %v1761, %v1697
        %v1794 = vmul.f32 %v1762, %v1698
        %v1795 = vmul.f32 %v1763, %v1699
        %v1796 = vmul.f32 %v1764, %v1700
        %v1797 = vmul.f32 %v1765, %v1701
        %v1798 = vmul.f32 %v1766, %v1702
        %v1799 = vmul.f32 %v1767, %v1703
        %v1800 = vmul.f32 %v1768, %v1704
        %v1801 = vmul.f32 %v1769, %v1705
        %v1802 = vmul.f32 %v1770, %v1706
        %v1803 = vmul.f32 %v1771, %v1707
        %v1804 = vmul.f32 %v1772, %v1708
        %v1805 = vmul.f32 %v1773, %v1709
        %v1806 = vmul.f32 %v1774, %v1710
        %v1807 = vmul.f32 %v1775, %v1711
        %v1808 = vmul.f32 %v1776, %v1712
        %v1809 = vmul.f32 %v1777, %v1713
        %v1810 = vmul.f32 %v1778, %v1714
        %v1811 = vmul.f32 %v1779, %v1715
        %v1812 = vmul.f32 %v1780, %v1716
        %v1813 = vmul.f32 %v1781, %v1717
        %v1814 = vmul.f32 %v1782, %v1718
        %v1815 = vmul.f32 %v1783, %v1719
        %v1816 = vmul.f32 %v1784, %v1720
        %v1817 = vmul.f32 %v1785, %v1721
        %v1818 = vmul.f32 %v1786, %v1722
        %v1819 = vmul.f32 %v1787, %v1723
        %v1820 = vmul.f32 %v1788, %v1724
        %v1821 = vmul.f32 %v1789, %v1725
        %v1822 = vmul.f32 %v1790, %v1726
        %v1823 = vmul.f32 %v1791, %v1727
        %v1824 = vmul.f32 %v1792, %v1728
        %v1825 = vmul.f32 %v1793, 0.044715
        %v1826 = vmul.f32 %v1794, 0.044715
        %v1827 = vmul.f32 %v1795, 0.044715
        %v1828 = vmul.f32 %v1796, 0.044715
        %v1829 = vmul.f32 %v1797, 0.044715
        %v1830 = vmul.f32 %v1798, 0.044715
        %v1831 = vmul.f32 %v1799, 0.044715
        %v1832 = vmul.f32 %v1800, 0.044715
        %v1833 = vmul.f32 %v1801, 0.044715
        %v1834 = vmul.f32 %v1802, 0.044715
        %v1835 = vmul.f32 %v1803, 0.044715
        %v1836 = vmul.f32 %v1804, 0.044715
        %v1837 = vmul.f32 %v1805, 0.044715
        %v1838 = vmul.f32 %v1806, 0.044715
        %v1839 = vmul.f32 %v1807, 0.044715
        %v1840 = vmul.f32 %v1808, 0.044715
        %v1841 = vmul.f32 %v1809, 0.044715
        %v1842 = vmul.f32 %v1810, 0.044715
        %v1843 = vmul.f32 %v1811, 0.044715
        %v1844 = vmul.f32 %v1812, 0.044715
        %v1845 = vmul.f32 %v1813, 0.044715
        %v1846 = vmul.f32 %v1814, 0.044715
        %v1847 = vmul.f32 %v1815, 0.044715
        %v1848 = vmul.f32 %v1816, 0.044715
        %v1849 = vmul.f32 %v1817, 0.044715
        %v1850 = vmul.f32 %v1818, 0.044715
        %v1851 = vmul.f32 %v1819, 0.044715
        %v1852 = vmul.f32 %v1820, 0.044715
        %v1853 = vmul.f32 %v1821, 0.044715
        %v1854 = vmul.f32 %v1822, 0.044715
        %v1855 = vmul.f32 %v1823, 0.044715
        %v1856 = vmul.f32 %v1824, 0.044715
        %v1857 = vadd.f32 %v1697, %v1825
        %v1858 = vadd.f32 %v1698, %v1826
        %v1859 = vadd.f32 %v1699, %v1827
        %v1860 = vadd.f32 %v1700, %v1828
        %v1861 = vadd.f32 %v1701, %v1829
        %v1862 = vadd.f32 %v1702, %v1830
        %v1863 = vadd.f32 %v1703, %v1831
        %v1864 = vadd.f32 %v1704, %v1832
        %v1865 = vadd.f32 %v1705, %v1833
        %v1866 = vadd.f32 %v1706, %v1834
        %v1867 = vadd.f32 %v1707, %v1835
        %v1868 = vadd.f32 %v1708, %v1836
        %v1869 = vadd.f32 %v1709, %v1837
        %v1870 = vadd.f32 %v1710, %v1838
        %v1871 = vadd.f32 %v1711, %v1839
        %v1872 = vadd.f32 %v1712, %v1840
        %v1873 = vadd.f32 %v1713, %v1841
        %v1874 = vadd.f32 %v1714, %v1842
        %v1875 = vadd.f32 %v1715, %v1843
        %v1876 = vadd.f32 %v1716, %v1844
        %v1877 = vadd.f32 %v1717, %v1845
        %v1878 = vadd.f32 %v1718, %v1846
        %v1879 = vadd.f32 %v1719, %v1847
        %v1880 = vadd.f32 %v1720, %v1848
        %v1881 = vadd.f32 %v1721, %v1849
        %v1882 = vadd.f32 %v1722, %v1850
        %v1883 = vadd.f32 %v1723, %v1851
        %v1884 = vadd.f32 %v1724, %v1852
        %v1885 = vadd.f32 %v1725, %v1853
        %v1886 = vadd.f32 %v1726, %v1854
        %v1887 = vadd.f32 %v1727, %v1855
        %v1888 = vadd.f32 %v1728, %v1856
        %v1889 = vmul.f32 %v1857, 0.7978846
        %v1890 = vmul.f32 %v1858, 0.7978846
        %v1891 = vmul.f32 %v1859, 0.7978846
        %v1892 = vmul.f32 %v1860, 0.7978846
        %v1893 = vmul.f32 %v1861, 0.7978846
        %v1894 = vmul.f32 %v1862, 0.7978846
        %v1895 = vmul.f32 %v1863, 0.7978846
        %v1896 = vmul.f32 %v1864, 0.7978846
        %v1897 = vmul.f32 %v1865, 0.7978846
        %v1898 = vmul.f32 %v1866, 0.7978846
        %v1899 = vmul.f32 %v1867, 0.7978846
        %v1900 = vmul.f32 %v1868, 0.7978846
        %v1901 = vmul.f32 %v1869, 0.7978846
        %v1902 = vmul.f32 %v1870, 0.7978846
        %v1903 = vmul.f32 %v1871, 0.7978846
        %v1904 = vmul.f32 %v1872, 0.7978846
        %v1905 = vmul.f32 %v1873, 0.7978846
        %v1906 = vmul.f32 %v1874, 0.7978846
        %v1907 = vmul.f32 %v1875, 0.7978846
        %v1908 = vmul.f32 %v1876, 0.7978846
        %v1909 = vmul.f32 %v1877, 0.7978846
        %v1910 = vmul.f32 %v1878, 0.7978846
        %v1911 = vmul.f32 %v1879, 0.7978846
        %v1912 = vmul.f32 %v1880, 0.7978846
        %v1913 = vmul.f32 %v1881, 0.7978846
        %v1914 = vmul.f32 %v1882, 0.7978846
        %v1915 = vmul.f32 %v1883, 0.7978846
        %v1916 = vmul.f32 %v1884, 0.7978846
        %v1917 = vmul.f32 %v1885, 0.7978846
        %v1918 = vmul.f32 %v1886, 0.7978846
        %v1919 = vmul.f32 %v1887, 0.7978846
        %v1920 = vmul.f32 %v1888, 0.7978846
        %v1921 = vtanh.pop %v1889
        %v1922 = vtanh.pop %v1890
        %v1923 = vtanh.pop %v1891
        %v1924 = vtanh.pop %v1892
        %v1925 = vtanh.pop %v1893
        %v1926 = vtanh.pop %v1894
        %v1927 = vtanh.pop %v1895
        %v1928 = vtanh.pop %v1896
        %v1929 = vtanh.pop %v1897
        %v1930 = vtanh.pop %v1898
        %v1931 = vtanh.pop %v1899
        %v1932 = vtanh.pop %v1900
        %v1933 = vtanh.pop %v1901
        %v1934 = vtanh.pop %v1902
        %v1935 = vtanh.pop %v1903
        %v1936 = vtanh.pop %v1904
        %v1937 = vtanh.pop %v1905
        %v1938 = vtanh.pop %v1906
        %v1939 = vtanh.pop %v1907
        %v1940 = vtanh.pop %v1908
        %v1941 = vtanh.pop %v1909
        %v1942 = vtanh.pop %v1910
        %v1943 = vtanh.pop %v1911
        %v1944 = vtanh.pop %v1912
        %v1945 = vtanh.pop %v1913
        %v1946 = vtanh.pop %v1914
        %v1947 = vtanh.pop %v1915
        %v1948 = vtanh.pop %v1916
        %v1949 = vtanh.pop %v1917
        %v1950 = vtanh.pop %v1918
        %v1951 = vtanh.pop %v1919
        %v1952 = vtanh.pop %v1920
        %v1953 = vadd.f32 %v1921, 1.0
        %v1954 = vadd.f32 %v1922, 1.0
        %v1955 = vadd.f32 %v1923, 1.0
        %v1956 = vadd.f32 %v1924, 1.0
        %v1957 = vadd.f32 %v1925, 1.0
        %v1958 = vadd.f32 %v1926, 1.0
        %v1959 = vadd.f32 %v1927, 1.0
        %v1960 = vadd.f32 %v1928, 1.0
        %v1961 = vadd.f32 %v1929, 1.0
        %v1962 = vadd.f32 %v1930, 1.0
        %v1963 = vadd.f32 %v1931, 1.0
        %v1964 = vadd.f32 %v1932, 1.0
        %v1965 = vadd.f32 %v1933, 1.0
        %v1966 = vadd.f32 %v1934, 1.0
        %v1967 = vadd.f32 %v1935, 1.0
        %v1968 = vadd.f32 %v1936, 1.0
        %v1969 = vadd.f32 %v1937, 1.0
        %v1970 = vadd.f32 %v1938, 1.0
        %v1971 = vadd.f32 %v1939, 1.0
        %v1972 = vadd.f32 %v1940, 1.0
        %v1973 = vadd.f32 %v1941, 1.0
        %v1974 = vadd.f32 %v1942, 1.0
        %v1975 = vadd.f32 %v1943, 1.0
        %v1976 = vadd.f32 %v1944, 1.0
        %v1977 = vadd.f32 %v1945, 1.0
        %v1978 = vadd.f32 %v1946, 1.0
        %v1979 = vadd.f32 %v1947, 1.0
        %v1980 = vadd.f32 %v1948, 1.0
        %v1981 = vadd.f32 %v1949, 1.0
        %v1982 = vadd.f32 %v1950, 1.0
        %v1983 = vadd.f32 %v1951, 1.0
        %v1984 = vadd.f32 %v1952, 1.0
        %v1985 = vmul.f32 %v1729, %v1953
        %v1986 = vmul.f32 %v1730, %v1954
        %v1987 = vmul.f32 %v1731, %v1955
        %v1988 = vmul.f32 %v1732, %v1956
        %v1989 = vmul.f32 %v1733, %v1957
        %v1990 = vmul.f32 %v1734, %v1958
        %v1991 = vmul.f32 %v1735, %v1959
        %v1992 = vmul.f32 %v1736, %v1960
        %v1993 = vmul.f32 %v1737, %v1961
        %v1994 = vmul.f32 %v1738, %v1962
        %v1995 = vmul.f32 %v1739, %v1963
        %v1996 = vmul.f32 %v1740, %v1964
        %v1997 = vmul.f32 %v1741, %v1965
        %v1998 = vmul.f32 %v1742, %v1966
        %v1999 = vmul.f32 %v1743, %v1967
        %v2000 = vmul.f32 %v1744, %v1968
        %v2001 = vmul.f32 %v1745, %v1969
        %v2002 = vmul.f32 %v1746, %v1970
        %v2003 = vmul.f32 %v1747, %v1971
        %v2004 = vmul.f32 %v1748, %v1972
        %v2005 = vmul.f32 %v1749, %v1973
        %v2006 = vmul.f32 %v1750, %v1974
        %v2007 = vmul.f32 %v1751, %v1975
        %v2008 = vmul.f32 %v1752, %v1976
        %v2009 = vmul.f32 %v1753, %v1977
        %v2010 = vmul.f32 %v1754, %v1978
        %v2011 = vmul.f32 %v1755, %v1979
        %v2012 = vmul.f32 %v1756, %v1980
        %v2013 = vmul.f32 %v1757, %v1981
        %v2014 = vmul.f32 %v1758, %v1982
        %v2015 = vmul.f32 %v1759, %v1983
        %v2016 = vmul.f32 %v1760, %v1984
        %v2017 = vpack.c.bf16 %v1986, %v1985
        %v2018 = vpack.c.bf16 %v1988, %v1987
        %v2019 = vpack.c.bf16 %v1990, %v1989
        %v2020 = vpack.c.bf16 %v1992, %v1991
        %v2021 = vpack.c.bf16 %v1994, %v1993
        %v2022 = vpack.c.bf16 %v1996, %v1995
        %v2023 = vpack.c.bf16 %v1998, %v1997
        %v2024 = vpack.c.bf16 %v2000, %v1999
        %v2025 = vpack.c.bf16 %v2002, %v2001
        %v2026 = vpack.c.bf16 %v2004, %v2003
        %v2027 = vpack.c.bf16 %v2006, %v2005
        %v2028 = vpack.c.bf16 %v2008, %v2007
        %v2029 = vpack.c.bf16 %v2010, %v2009
        %v2030 = vpack.c.bf16 %v2012, %v2011
        %v2031 = vpack.c.bf16 %v2014, %v2013
        %v2032 = vpack.c.bf16 %v2016, %v2015
        %v2033 = vld [vmem:[%s5] sm:$0xf]
        %v2034 = vld [vmem:[%s5 + $0x4] sm:$0xf]
        %v2035 = vld [vmem:[%s5 + $0x8] sm:$0xf]
        %v2036 = vld [vmem:[%s5 + $0xc] sm:$0xf]
        %v2037 = vld [vmem:[%s5 + $0x10] sm:$0xf]
        %v2038 = vld [vmem:[%s5 + $0x14] sm:$0xf]
        %v2039 = vld [vmem:[%s5 + $0x18] sm:$0xf]
        %v2040 = vld [vmem:[%s5 + $0x1c] sm:$0xf]
        %v2041 = vld [vmem:[%s5 + $0x20] sm:$0xf]
        %v2042 = vld [vmem:[%s5 + $0x24] sm:$0xf]
        %v2043 = vld [vmem:[%s5 + $0x28] sm:$0xf]
        %v2044 = vld [vmem:[%s5 + $0x2c] sm:$0xf]
        %v2045 = vld [vmem:[%s5 + $0x30] sm:$0xf]
        %v2046 = vld [vmem:[%s5 + $0x34] sm:$0xf]
        %v2047 = vld [vmem:[%s5 + $0x38] sm:$0xf]
        %v2048 = vld [vmem:[%s5 + $0x3c] sm:$0xf]
        %v2049 = vld [vmem:[%s6] sm:$0x1]
        %v2051 = vperm.slane %v2049, 0
        %v2069 = vunpack.c.l.b16 %v2033
        %v2070 = vunpack.c.l.b16 %v2034
        %v2071 = vunpack.c.l.b16 %v2035
        %v2072 = vunpack.c.l.b16 %v2036
        %v2073 = vunpack.c.l.b16 %v2037
        %v2074 = vunpack.c.l.b16 %v2038
        %v2075 = vunpack.c.l.b16 %v2039
        %v2076 = vunpack.c.l.b16 %v2040
        %v2077 = vunpack.c.l.b16 %v2041
        %v2078 = vunpack.c.l.b16 %v2042
        %v2079 = vunpack.c.l.b16 %v2043
        %v2080 = vunpack.c.l.b16 %v2044
        %v2081 = vunpack.c.l.b16 %v2045
        %v2082 = vunpack.c.l.b16 %v2046
        %v2083 = vunpack.c.l.b16 %v2047
        %v2084 = vunpack.c.l.b16 %v2048
        %v2085 = vpack.c.b16 %v2070, %v2069
        %v2086 = vpack.c.b16 %v2072, %v2071
        %v2087 = vpack.c.b16 %v2074, %v2073
        %v2088 = vpack.c.b16 %v2076, %v2075
        %v2089 = vpack.c.b16 %v2078, %v2077
        %v2090 = vpack.c.b16 %v2080, %v2079
        %v2091 = vpack.c.b16 %v2082, %v2081
        %v2092 = vpack.c.b16 %v2084, %v2083
        %2101 = vmatpush.bf16.msra.mxu0 %v2092
        %2102 = vmatpush.bf16.msra.mxu0 %v2091
        %2103 = vmatpush.bf16.msra.mxu0 %v2090
        %2104 = vmatpush.bf16.msra.mxu0 %v2089
        %2105 = vmatpush.bf16.msra.mxu0 %v2088
        %2106 = vmatpush.bf16.msra.mxu0 %v2087
        %2107 = vmatpush.bf16.msra.mxu0 %v2086
        %2108 = vmatpush.bf16.msra.mxu0 %v2085
        %2109 = vmatmul.bf16.gmra.mxu0 %v2017
        %v2110 = vpop.f32.mrf.mxu0
        %v2111 = vadd.f32 %v2051, %v2110
        %v2112 = vpop.f32.mrf.mxu0
        %v2113 = vadd.f32 %v2051, %v2112
        %2114 = vmatmul.bf16.gmra.mxu0 %v2018
        %v2115 = vpop.f32.mrf.mxu0
        %v2116 = vadd.f32 %v2051, %v2115
        %v2117 = vpop.f32.mrf.mxu0
        %v2118 = vadd.f32 %v2051, %v2117
        %2119 = vmatmul.bf16.gmra.mxu0 %v2019
        %v2120 = vpop.f32.mrf.mxu0
        %v2121 = vadd.f32 %v2051, %v2120
        %v2122 = vpop.f32.mrf.mxu0
        %v2123 = vadd.f32 %v2051, %v2122
        %2124 = vmatmul.bf16.gmra.mxu0 %v2020
        %v2125 = vpop.f32.mrf.mxu0
        %v2126 = vadd.f32 %v2051, %v2125
        %v2127 = vpop.f32.mrf.mxu0
        %v2128 = vadd.f32 %v2051, %v2127
        %2129 = vmatmul.bf16.gmra.mxu0 %v2021
        %v2130 = vpop.f32.mrf.mxu0
        %v2131 = vadd.f32 %v2051, %v2130
        %v2132 = vpop.f32.mrf.mxu0
        %v2133 = vadd.f32 %v2051, %v2132
        %2134 = vmatmul.bf16.gmra.mxu0 %v2022
        %v2135 = vpop.f32.mrf.mxu0
        %v2136 = vadd.f32 %v2051, %v2135
        %v2137 = vpop.f32.mrf.mxu0
        %v2138 = vadd.f32 %v2051, %v2137
        %2139 = vmatmul.bf16.gmra.mxu0 %v2023
        %v2140 = vpop.f32.mrf.mxu0
        %v2141 = vadd.f32 %v2051, %v2140
        %v2142 = vpop.f32.mrf.mxu0
        %v2143 = vadd.f32 %v2051, %v2142
        %2144 = vmatmul.bf16.gmra.mxu0 %v2024
        %v2145 = vpop.f32.mrf.mxu0
        %v2146 = vadd.f32 %v2051, %v2145
        %v2147 = vpop.f32.mrf.mxu0
        %v2148 = vadd.f32 %v2051, %v2147
        %2149 = vmatmul.bf16.gmra.mxu0 %v2025
        %v2150 = vpop.f32.mrf.mxu0
        %v2151 = vadd.f32 %v2051, %v2150
        %v2152 = vpop.f32.mrf.mxu0
        %v2153 = vadd.f32 %v2051, %v2152
        %2154 = vmatmul.bf16.gmra.mxu0 %v2026
        %v2155 = vpop.f32.mrf.mxu0
        %v2156 = vadd.f32 %v2051, %v2155
        %v2157 = vpop.f32.mrf.mxu0
        %v2158 = vadd.f32 %v2051, %v2157
        %2159 = vmatmul.bf16.gmra.mxu0 %v2027
        %v2160 = vpop.f32.mrf.mxu0
        %v2161 = vadd.f32 %v2051, %v2160
        %v2162 = vpop.f32.mrf.mxu0
        %v2163 = vadd.f32 %v2051, %v2162
        %2164 = vmatmul.bf16.gmra.mxu0 %v2028
        %v2165 = vpop.f32.mrf.mxu0
        %v2166 = vadd.f32 %v2051, %v2165
        %v2167 = vpop.f32.mrf.mxu0
        %v2168 = vadd.f32 %v2051, %v2167
        %2169 = vmatmul.bf16.gmra.mxu0 %v2029
        %v2170 = vpop.f32.mrf.mxu0
        %v2171 = vadd.f32 %v2051, %v2170
        %v2172 = vpop.f32.mrf.mxu0
        %v2173 = vadd.f32 %v2051, %v2172
        %2174 = vmatmul.bf16.gmra.mxu0 %v2030
        %v2175 = vpop.f32.mrf.mxu0
        %v2176 = vadd.f32 %v2051, %v2175
        %v2177 = vpop.f32.mrf.mxu0
        %v2178 = vadd.f32 %v2051, %v2177
        %2179 = vmatmul.bf16.gmra.mxu0 %v2031
        %v2180 = vpop.f32.mrf.mxu0
        %v2181 = vadd.f32 %v2051, %v2180
        %v2182 = vpop.f32.mrf.mxu0
        %v2183 = vadd.f32 %v2051, %v2182
        %2184 = vmatmul.bf16.gmra.mxu0 %v2032
        %v2185 = vpop.f32.mrf.mxu0
        %v2186 = vadd.f32 %v2051, %v2185
        %v2187 = vpop.f32.mrf.mxu0
        %v2188 = vadd.f32 %v2051, %v2187
        %2189 = vdwg.mxu0
        %v2190 = vld [vmem:[%s267] sm:$0xff]
        %v2191 = vld [vmem:[%s267 + $0x8] sm:$0xff]
        %v2192 = vld [vmem:[%s267 + $0x10] sm:$0xff]
        %v2193 = vld [vmem:[%s267 + $0x18] sm:$0xff]
        %v2194 = vld [vmem:[%s267 + $0x20] sm:$0xff]
        %v2195 = vld [vmem:[%s267 + $0x28] sm:$0xff]
        %v2196 = vld [vmem:[%s267 + $0x30] sm:$0xff]
        %v2197 = vld [vmem:[%s267 + $0x38] sm:$0xff]
        %v2198 = vld [vmem:[%s267 + $0x40] sm:$0xff]
        %v2199 = vld [vmem:[%s267 + $0x48] sm:$0xff]
        %v2200 = vld [vmem:[%s267 + $0x50] sm:$0xff]
        %v2201 = vld [vmem:[%s267 + $0x58] sm:$0xff]
        %v2202 = vld [vmem:[%s267 + $0x60] sm:$0xff]
        %v2203 = vld [vmem:[%s267 + $0x68] sm:$0xff]
        %v2204 = vld [vmem:[%s267 + $0x70] sm:$0xff]
        %v2205 = vld [vmem:[%s267 + $0x78] sm:$0xff]
        %v2206 = vld [vmem:[%s267 + $0x80] sm:$0xff]
        %v2207 = vld [vmem:[%s267 + $0x88] sm:$0xff]
        %v2208 = vld [vmem:[%s267 + $0x90] sm:$0xff]
        %v2209 = vld [vmem:[%s267 + $0x98] sm:$0xff]
        %v2210 = vld [vmem:[%s267 + $0xa0] sm:$0xff]
        %v2211 = vld [vmem:[%s267 + $0xa8] sm:$0xff]
        %v2212 = vld [vmem:[%s267 + $0xb0] sm:$0xff]
        %v2213 = vld [vmem:[%s267 + $0xb8] sm:$0xff]
        %v2214 = vld [vmem:[%s267 + $0xc0] sm:$0xff]
        %v2215 = vld [vmem:[%s267 + $0xc8] sm:$0xff]
        %v2216 = vld [vmem:[%s267 + $0xd0] sm:$0xff]
        %v2217 = vld [vmem:[%s267 + $0xd8] sm:$0xff]
        %v2218 = vld [vmem:[%s267 + $0xe0] sm:$0xff]
        %v2219 = vld [vmem:[%s267 + $0xe8] sm:$0xff]
        %v2220 = vld [vmem:[%s267 + $0xf0] sm:$0xff]
        %v2221 = vld [vmem:[%s267 + $0xf8] sm:$0xff]
        %v2222 = vadd.f32 %v2111, %v2190
        %v2223 = vadd.f32 %v2113, %v2191
        %v2224 = vadd.f32 %v2116, %v2192
        %v2225 = vadd.f32 %v2118, %v2193
        %v2226 = vadd.f32 %v2121, %v2194
        %v2227 = vadd.f32 %v2123, %v2195
        %v2228 = vadd.f32 %v2126, %v2196
        %v2229 = vadd.f32 %v2128, %v2197
        %v2230 = vadd.f32 %v2131, %v2198
        %v2231 = vadd.f32 %v2133, %v2199
        %v2232 = vadd.f32 %v2136, %v2200
        %v2233 = vadd.f32 %v2138, %v2201
        %v2234 = vadd.f32 %v2141, %v2202
        %v2235 = vadd.f32 %v2143, %v2203
        %v2236 = vadd.f32 %v2146, %v2204
        %v2237 = vadd.f32 %v2148, %v2205
        %v2238 = vadd.f32 %v2151, %v2206
        %v2239 = vadd.f32 %v2153, %v2207
        %v2240 = vadd.f32 %v2156, %v2208
        %v2241 = vadd.f32 %v2158, %v2209
        %v2242 = vadd.f32 %v2161, %v2210
        %v2243 = vadd.f32 %v2163, %v2211
        %v2244 = vadd.f32 %v2166, %v2212
        %v2245 = vadd.f32 %v2168, %v2213
        %v2246 = vadd.f32 %v2171, %v2214
        %v2247 = vadd.f32 %v2173, %v2215
        %v2248 = vadd.f32 %v2176, %v2216
        %v2249 = vadd.f32 %v2178, %v2217
        %v2250 = vadd.f32 %v2181, %v2218
        %v2251 = vadd.f32 %v2183, %v2219
        %v2252 = vadd.f32 %v2186, %v2220
        %v2253 = vadd.f32 %v2188, %v2221
        %2254 = vst.msk [vmem:[%s298] sm:$0xff] %vm368, %v2222
        %2255 = vst.msk [vmem:[%s298 + $0x8] sm:$0xff] %vm368, %v2223
        %2256 = vst.msk [vmem:[%s298 + $0x10] sm:$0xff] %vm368, %v2224
        %2257 = vst.msk [vmem:[%s298 + $0x18] sm:$0xff] %vm368, %v2225
        %2258 = vst.msk [vmem:[%s298 + $0x20] sm:$0xff] %vm368, %v2226
        %2259 = vst.msk [vmem:[%s298 + $0x28] sm:$0xff] %vm368, %v2227
        %2260 = vst.msk [vmem:[%s298 + $0x30] sm:$0xff] %vm368, %v2228
        %2261 = vst.msk [vmem:[%s298 + $0x38] sm:$0xff] %vm368, %v2229
        %2262 = vst.msk [vmem:[%s298 + $0x40] sm:$0xff] %vm368, %v2230
        %2263 = vst.msk [vmem:[%s298 + $0x48] sm:$0xff] %vm368, %v2231
        %2264 = vst.msk [vmem:[%s298 + $0x50] sm:$0xff] %vm368, %v2232
        %2265 = vst.msk [vmem:[%s298 + $0x58] sm:$0xff] %vm368, %v2233
        %2266 = vst.msk [vmem:[%s298 + $0x60] sm:$0xff] %vm368, %v2234
        %2267 = vst.msk [vmem:[%s298 + $0x68] sm:$0xff] %vm368, %v2235
        %2268 = vst.msk [vmem:[%s298 + $0x70] sm:$0xff] %vm368, %v2236
        %2269 = vst.msk [vmem:[%s298 + $0x78] sm:$0xff] %vm368, %v2237
        %2270 = vst.msk [vmem:[%s298 + $0x80] sm:$0xff] %vm368, %v2238
        %2271 = vst.msk [vmem:[%s298 + $0x88] sm:$0xff] %vm368, %v2239
        %2272 = vst.msk [vmem:[%s298 + $0x90] sm:$0xff] %vm368, %v2240
        %2273 = vst.msk [vmem:[%s298 + $0x98] sm:$0xff] %vm368, %v2241
        %2274 = vst.msk [vmem:[%s298 + $0xa0] sm:$0xff] %vm368, %v2242
        %2275 = vst.msk [vmem:[%s298 + $0xa8] sm:$0xff] %vm368, %v2243
        %2276 = vst.msk [vmem:[%s298 + $0xb0] sm:$0xff] %vm368, %v2244
        %2277 = vst.msk [vmem:[%s298 + $0xb8] sm:$0xff] %vm368, %v2245
        %2278 = vst.msk [vmem:[%s298 + $0xc0] sm:$0xff] %vm368, %v2246
        %2279 = vst.msk [vmem:[%s298 + $0xc8] sm:$0xff] %vm368, %v2247
        %2280 = vst.msk [vmem:[%s298 + $0xd0] sm:$0xff] %vm368, %v2248
        %2281 = vst.msk [vmem:[%s298 + $0xd8] sm:$0xff] %vm368, %v2249
        %2282 = vst.msk [vmem:[%s298 + $0xe0] sm:$0xff] %vm368, %v2250
        %2283 = vst.msk [vmem:[%s298 + $0xe8] sm:$0xff] %vm368, %v2251
        %2284 = vst.msk [vmem:[%s298 + $0xf0] sm:$0xff] %vm368, %v2252
        %2285 = vst.msk [vmem:[%s298 + $0xf8] sm:$0xff] %vm368, %v2253
        %s2286 = sand.u32 %s184, 1
        %s2287 = scalar_lea.sflag [#allocation5], %s2286
        %s2288 = sand.u32 %s184, 1
        %s2289 = smul.addr %s2288, 256
        %s2290 = scalar_lea.vmem [#allocation6], %s2289
        // Predicated region
        $region53: #{mbconv_block_forward.1} parent=47 // pred_check
          %p2291 = pneg %p194
        $region54: #{mbconv_block_forward.1} parent=47 // pred_check_branch
          %2293 = sbr.rel (%p2291) target = $region56
        $region55: #{mbconv_block_forward.1} parent=47 // pred_region
          %2295 = vsyncadd %s2287, 0
          %s2296 = smul.addr %s24, 32
          %s2297 = smul.addr %s2296, 8
          %s2298 = scalar_lea.hbm %s7, %s2297
          %s2299 = sshll.u32 %s2290, 4
          %s2300 = int_to_ptr.vmem [resolvable:$true] %s2299
          %s2301 = sshll.u32 %s2298, 4
          %s2302 = int_to_ptr.hbm [resolvable:$true] %s2301
          %2307 = dma.vmem_to_hbm [thread:$0]  %s2300, 4096, %s2302, %s2287, 128, 128, 8
        $region56: #{mbconv_block_forward.1} parent=47 // pred_fallthru
          _
      $region48: #{mbconv_block_forward.1} parent=5 // pred_fallthru
        _
      %p2308 = scmp.le.s32.totalorder 2, %s19
      // Predicated region
      $region57: #{mbconv_block_forward.1} parent=5 // pred_check
        %p2309 = pneg %p2308
      $region58: #{mbconv_block_forward.1} parent=5 // pred_check_branch
        %2311 = sbr.rel (%p2309) target = $region60
      $region59: #{mbconv_block_forward.1} parent=5 // pred_region
        %s2312 = ssub.s32 %s19, 2
        // Predicated region
        $region61: #{mbconv_block_forward.1} parent=59 // pred_check
          %p2313 = pneg %p200
        $region62: #{mbconv_block_forward.1} parent=59 // pred_check_branch
          %2315 = sbr.rel (%p2313) target = $region64
        $region63: #{mbconv_block_forward.1} parent=59 // pred_region
          %s2316 = sand.u32 %s185, 1
          %s2317 = scalar_lea.sflag [#allocation5], %s2316
          %s2318 = sand.u32 %s185, 1
          %s2319 = smul.addr %s2318, 256
          %s2320 = scalar_lea.vmem [#allocation6], %s2319
          %2322 = dma.done %s2317, 4096
        $region64: #{mbconv_block_forward.1} parent=59 // pred_fallthru
          _
      $region60: #{mbconv_block_forward.1} parent=5 // pred_fallthru
        _
    $region6: #{mbconv_block_forward.1} parent=1 // loop_footer
      %s23 = sadd.s32 1, %s19
    $region7: #{mbconv_block_forward.1} parent=1 // loop_footer_branch
      %18 = sbr.rel target = $region3
    $region8: #{mbconv_block_forward.1} parent=1 // loop_exit
      _
    %2323 = vsyncpa [#allocation4], 1
    %s2324 = scalar_lea.sflag [#allocation4], 1
    %2325 = vsyncpa %s2324, 1
    %2326 = vsyncpa [#allocation5], 1
    %s2327 = scalar_lea.sflag [#allocation5], 1
    %2328 = vsyncpa %s2327, 1

</llo_original>
